<compile_context>
chip_gen: v7x
topology: tpu7x:2x2x1
jax: 0.10.0
libtpu: 0.0.40
codegen_flags: <defaults>
</compile_context>

<pallas_src>
import functools
import math
import numbers
from collections.abc import Sequence

import jax
import jax.numpy as jnp
import numpy as np
from jax.experimental import pallas as pl
from jax.experimental.pallas import tpu as pltpu


# ----------------------------- Pallas kernel --------------------------------

def _affine_gather_kernel(kstart_ref, klen_ref, src_ref, fill_ref, plane_ref,
                          out_ref, acc_ref, *, tk, lane_chunk):
    """One (output-tile t, band-step k) step of the banded one-hot gather.

    kstart_ref : SMEM (n_tiles,) i32   first source tile of tile t's band
    klen_ref   : SMEM (n_tiles,) i32   number of source tiles in that band
    src_ref    : VMEM (1, thw)   i32   flattened source index per output pixel
                                       of this (th x tw) tile (-1 = OOB / pad)
    fill_ref   : VMEM (NC, 128)  f32   per-(n,c)-row fill value (lane broadcast)
    plane_ref  : VMEM (NC, tk)   bf16  image slab tile (batch*channel rows)
    out_ref    : VMEM (NC, thw)        output tile (tile-major layout)
    acc_ref    : VMEM (NC, thw)  f32   accumulator (persists across k)
    """
    t = pl.program_id(0)
    k = pl.program_id(1)
    nk = pl.num_programs(1)
    thw = acc_ref.shape[-1]

    @pl.when(k == 0)
    def _init():
        acc_ref[...] = jnp.zeros_like(acc_ref)

    @pl.when(k < klen_ref[t])
    def _accumulate():
        base = (kstart_ref[t] + k) * tk
        rows = base + jax.lax.broadcasted_iota(jnp.int32, (tk, 1), 0)
        plane = plane_ref[...]                                   # (NC, tk) bf16
        # Lane-chunked one-hot selection: each (tk, lane_chunk) sel stays well
        # below the VMEM-spill / single-vst-slot threshold (v5e especially).
        # Exact int32 compare; 0/1 values are exact in bf16 -> full-rate MXU.
        # TODO(synk): for very small N*C a VPU/DMA gather variant (no MXU
        # one-hot) could win outright; not implemented here.
        for c0 in range(0, thw, lane_chunk):
            src_c = src_ref[:, c0:c0 + lane_chunk]               # (1, lc) i32
            sel = (rows == src_c).astype(jnp.bfloat16)           # (tk, lc)
            acc_ref[:, c0:c0 + lane_chunk] += jnp.dot(
                plane, sel, preferred_element_type=jnp.float32)

    @pl.when(k == nk - 1)
    def _finalize():
        # OOB output pixels never matched any source row; composite the
        # per-(n,c) fill with a select (torchvision mask trick).
        oob = src_ref[...] < 0                                   # (1, thw)
        fill_col = fill_ref[:, 0:1]                              # (NC, 1)
        out_ref[...] = jnp.where(oob, fill_col,
                                 acc_ref[...]).astype(out_ref.dtype)


# ------------------------------ host helpers ---------------------------------

def _round_up(x, m):
    return (x + m - 1) // m * m


def _resolve_fill(fill, num_channels):
    if fill is None:
        fill = 0
    if isinstance(fill, numbers.Number):
        vals = [float(fill)] * num_channels
    else:
        vals = [float(f) for f in fill]
    if len(vals) == 1:
        vals = vals * num_channels
    if len(vals) != num_channels:
        if len(set(vals)) == 1:
            # the original forward's "[fill]*3" quirk: a uniform fill broadcasts
            vals = [vals[0]] * num_channels
        else:
            raise ValueError('fill must have {} elements, got {}'.format(
                num_channels, len(vals)))
    return vals


def _source_indices(matrix, H, W):
    """Flattened nearest-neighbor source index per output pixel (-1 = OOB).

    Replicates torchvision F.affine's tensor path: centered base grid, inverse
    matrix, align_corners=False un-normalization folded into "+ (W-1)/2",
    grid_sample(nearest, padding_mode='zeros') rounding (half-to-even).
    """
    a, b, c0, d, e, f0 = (float(v) for v in matrix)
    jj, ii = np.meshgrid(np.arange(W, dtype=np.float32),
                         np.arange(H, dtype=np.float32))
    xb = jj - (W - 1) * 0.5
    yb = ii - (H - 1) * 0.5
    x_src = a * xb + b * yb + c0 + (W - 1) * 0.5
    y_src = d * xb + e * yb + f0 + (H - 1) * 0.5
    xi = np.rint(x_src)          # round-half-to-even, like std::nearbyint
    yi = np.rint(y_src)
    inb = (xi >= 0) & (xi <= W - 1) & (yi >= 0) & (yi <= H - 1)
    src = np.where(inb, yi * W + xi, -1.0)
    return src.astype(np.int32).reshape(-1)


# ------------------------------ Pallas wrapper --------------------------------

def affine_nearest(img, matrix, fill, *, th=8, tw=128, tk=256, coef_bound=None):
    """Nearest-neighbor affine warp of an NCHW image.

    img        : (N, C, H, W) array
    matrix     : 6 floats, torchvision inverse-affine layout [a, b, c, d, e, f]
    fill       : number or per-channel sequence for out-of-bounds pixels
    th, tw     : output tile height / width (rounded up to 8 / 128)
    tk         : flattened source tile (band step) size, multiple of 128
    coef_bound : optional (|b|_max, |e|_max) bound on the inverse-matrix linear
                 coefficients; fixes the band grid extent across random draws
                 so one compiled kernel is re-used (no per-draw recompile).
    """
    N, C, H, W = img.shape
    NC, HW = N * C, H * W

    th = max(8, _round_up(int(th), 8))
    tw = max(128, _round_up(int(tw), 128))
    tk = max(128, _round_up(int(tk), 128))
    thw = th * tw

    H_pad = _round_up(H, th)
    W_pad = _round_up(W, tw)
    n_ti, n_tj = H_pad // th, W_pad // tw
    n_tiles = n_ti * n_tj
    HWp = _round_up(HW, tk)
    n_src = HWp // tk

    fill_c = _resolve_fill(fill, C)
    src_np = _source_indices(matrix, H, W)                 # (HW,) i32, -1 = OOB

    # --- tile-major rearrangement of the source-index map (host side) -------
    src_map = np.full((H_pad, W_pad), -1, dtype=np.int32)
    src_map[:H, :W] = src_np.reshape(H, W)
    src_tiles = (src_map.reshape(n_ti, th, n_tj, tw)
                 .transpose(0, 2, 1, 3).reshape(n_tiles, thw))

    # --- per-tile contiguous source band (matrix is trace-time known) -------
    valid = src_tiles >= 0
    lo = np.where(valid, src_tiles, np.iinfo(np.int32).max).min(axis=1)
    hi = np.where(valid, src_tiles, -1).max(axis=1)
    has = hi >= 0
    kstart = np.where(has, lo // tk, 0).astype(np.int32)
    klen = np.where(has, hi // tk - lo // tk + 1, 0).astype(np.int32)

    n_band = int(klen.max()) if klen.size else 0
    if coef_bound is not None:
        # Config-level worst case -> stable grid across random draws.
        b_max, e_max = coef_bound
        bound_elems = (th * float(e_max) + tw * float(b_max) + 4.0) * W * 1.05
        n_band = max(n_band, min(n_src, int(math.ceil(bound_elems / tk)) + 2))
    n_band = max(1, n_band)

    # --- image slab: (N*C, HWp), cast to bf16 ONCE here ---------------------
    # TODO(synk): exact-f32 gather would need a split-bf16 multi-pass matmul or
    # a non-MXU gather; bf16 rounding (<=2^-9 rel) is accepted here.
    plane = img.reshape(NC, HW).astype(jnp.bfloat16)
    if HWp != HW:
        plane = jnp.pad(plane, ((0, 0), (0, HWp - HW)))

    # per-(n,c)-row fill, lane-broadcast so its one-time load is unmasked
    fill_block = np.ascontiguousarray(
        np.broadcast_to(np.tile(np.asarray(fill_c, np.float32), N)[:, None],
                        (NC, 128)))

    # selection chunk: keep each (tk, lane_chunk) bf16 sel at <= ~128 KiB
    lane_chunk = min(thw, max(128, ((64 * 1024) // tk) // 128 * 128))
    while thw % lane_chunk:
        lane_chunk -= 128
    assert lane_chunk >= 128 and thw % lane_chunk == 0

    def plane_index_map(t, k, ks, kl):
        # Clamp to the END OF THIS TILE'S BAND: skipped band steps keep the
        # same block index, so the pipeline re-uses the buffer (no DMA).
        band_last = ks[t] + jnp.maximum(kl[t], 1) - 1
        return (0, jnp.minimum(ks[t] + k, band_last))

    kernel = functools.partial(_affine_gather_kernel, tk=tk,
                               lane_chunk=lane_chunk)
    grid_spec = pltpu.PrefetchScalarGridSpec(
        num_scalar_prefetch=2,
        grid=(n_tiles, n_band),
        in_specs=[
            pl.BlockSpec((1, thw), lambda t, k, ks, kl: (0, t)),      # src idx
            pl.BlockSpec((NC, 128), lambda t, k, ks, kl: (0, 0)),     # fill
            pl.BlockSpec((NC, tk), plane_index_map),                  # image
        ],
        out_specs=pl.BlockSpec((NC, thw), lambda t, k, ks, kl: (0, t)),
        scratch_shapes=[pltpu.VMEM((NC, thw), jnp.float32)],
    )
    out_flat = pl.pallas_call(
        kernel,
        out_shape=jax.ShapeDtypeStruct((NC, n_tiles * thw), img.dtype),
        grid_spec=grid_spec,
        compiler_params=pltpu.CompilerParams(
            # tile axis is independent -> megacore-shardable (v7x); band axis
            # is the reduction.  TODO(synk): interleave heavy-band tiles across
            # the two v7x TensorCores for better load balance.
            dimension_semantics=("parallel", "arbitrary"),
            # Block footprint at defaults is < 1 MiB; 32 MiB stays within every
            # generation's physical VMEM (v7x: 64 MiB physical).
            vmem_limit_bytes=32 * 1024 * 1024),
    )(jnp.asarray(kstart), jnp.asarray(klen),
      jnp.asarray(src_tiles.reshape(1, n_tiles * thw)),
      jnp.asarray(fill_block), plane)

    # undo the tile-major layout and strip padding
    out = (out_flat.reshape(NC, n_ti, n_tj, th, tw)
           .transpose(0, 1, 3, 2, 4)
           .reshape(N, C, H_pad, W_pad))
    return out[:, :, :H, :W].reshape(N, C, H, W)


def affine_nearest_ref(img, matrix, fill):
    """Pure-JAX reference (XLA gather) for correctness checking."""
    N, C, H, W = img.shape
    HW = H * W
    src = _source_indices(matrix, H, W)
    fill_c = jnp.asarray(np.asarray(_resolve_fill(fill, C), np.float32)
                         ).reshape(1, C, 1).astype(img.dtype)
    plane = img.reshape(N, C, HW)
    gathered = jnp.take(plane, jnp.asarray(np.where(src < 0, 0, src)), axis=2)
    inb = jnp.asarray((src >= 0).reshape(1, 1, HW))
    return jnp.where(inb, gathered, fill_c).reshape(N, C, H, W)


# ------------------------- module glue (plain Python) -----------------------

def _check_sequence_input(x, name, req_sizes):
    msg = req_sizes[0] if len(req_sizes) < 2 else ' or '.join(str(s) for s in req_sizes)
    if not isinstance(x, Sequence):
        raise TypeError('{} should be a sequence of length {}.'.format(name, msg))
    if len(x) not in req_sizes:
        raise ValueError('{} should be sequence of length {}.'.format(name, msg))


def _setup_angle(x, name, req_sizes=(2,)):
    if isinstance(x, numbers.Number):
        if x < 0:
            raise ValueError('If {} is a single number, it must be positive.'.format(name))
        x = [-x, x]
    else:
        _check_sequence_input(x, name, req_sizes)
    return [float(d) for d in x]


def _get_inverse_affine_matrix(center, angle, translate, scale, shear):
    # Port of torchvision.transforms.functional._get_inverse_affine_matrix.
    rot = math.radians(angle)
    sx = math.radians(shear[0])
    sy = math.radians(shear[1])
    cx, cy = center
    tx, ty = translate
    a = math.cos(rot - sy) / math.cos(sy)
    b = -math.cos(rot - sy) * math.tan(sx) / math.cos(sy) - math.sin(rot)
    c = math.sin(rot - sy) / math.cos(sy)
    d = -math.sin(rot - sy) * math.tan(sx) / math.cos(sy) + math.cos(rot)
    matrix = [d, -b, 0.0, -c, a, 0.0]
    matrix = [x / scale for x in matrix]
    matrix[2] += matrix[0] * (-cx - tx) + matrix[1] * (-cy - ty)
    matrix[5] += matrix[3] * (-cx - tx) + matrix[4] * (-cy - ty)
    matrix[2] += cx
    matrix[5] += cy
    return matrix


class MyRandomAffine:
    """JAX/Pallas port of myRandomAffine (nearest interpolation)."""
    # TODO(synk): only NEAREST interpolation is implemented (the module default);
    # BILINEAR would need a 4-tap weighted gather.

    def __init__(self, degrees, translate=None, inv_translate=None, scale=None,
                 inv_scale=None, shear=None, fill=0):
        self.degrees = _setup_angle(degrees, name='degrees', req_sizes=(2,))
        if translate is not None:
            _check_sequence_input(translate, 'translate', req_sizes=(2,))
            for t in translate:
                if not 0.0 <= t <= 1.0:
                    raise ValueError('translation values should be between 0 and 1')
        self.translate = translate
        if inv_translate is not None:
            _check_sequence_input(inv_translate, 'inv_translate', req_sizes=(2,))
        self.inv_translate = inv_translate
        if scale is not None:
            _check_sequence_input(scale, 'scale', req_sizes=(2,))
            for s in scale:
                if s <= 0:
                    raise ValueError('scale values should be positive')
        self.scale = scale
        self.inv_scale = inv_scale
        if shear is not None:
            self.shear = _setup_angle(shear, name='shear', req_sizes=(2, 4))
        else:
            self.shear = shear
        if fill is None:
            fill = 0
        elif not isinstance(fill, (Sequence, numbers.Number)):
            raise TypeError('Fill should be either a sequence or a number.')
        self.fill = fill
        # Config-level worst-case |b|, |e| of the inverse matrix: fixes the
        # band grid extent so random draws re-use one compiled kernel.
        self._coef_bound = self._compute_coef_bound()

    def _compute_coef_bound(self):
        angles = np.linspace(self.degrees[0], self.degrees[1], 61)
        if self.shear is not None:
            sxs = np.linspace(self.shear[0], self.shear[1], 13)
            sys = (np.linspace(self.shear[2], self.shear[3], 13)
                   if len(self.shear) == 4 else np.array([0.0]))
        else:
            sxs = np.array([0.0])
            sys = np.array([0.0])
        if self.scale is not None:
            s_min = float(min(self.scale))
        elif self.inv_scale is not None:
            s_min = float(self.inv_scale)
        else:
            s_min = 1.0
        b_max = e_max = 0.0
        for ang in angles:
            for sx in sxs:
                for sy in sys:
                    m = _get_inverse_affine_matrix(
                        [0.0, 0.0], float(ang), [0.0, 0.0], s_min,
                        (float(sx), float(sy)))
                    b_max = max(b_max, abs(m[1]))
                    e_max = max(e_max, abs(m[4]))
        return (b_max, e_max)

    def get_params(self, key, img_size):
        # NOTE: faithful to the original, which indexes img.shape (so
        # img_size[0]/[1] are N and C for an NCHW tensor).
        # TODO(synk): the host float() syncs are inherent to precomputing the
        # gather indices at trace time (the grid itself no longer depends on
        # the draw thanks to the config-level band bound).
        k1, k2, k3, k4, k5, k6 = jax.random.split(key, 6)
        degrees = self.degrees
        angle = float(jax.random.uniform(k1, (), minval=degrees[0], maxval=degrees[1]))
        if self.translate is not None:
            max_dx = float(self.translate[0] * img_size[0])
            max_dy = float(self.translate[1] * img_size[1])
            tx = int(round(float(jax.random.uniform(k2, (), minval=-max_dx, maxval=max_dx))))
            ty = int(round(float(jax.random.uniform(k3, (), minval=-max_dy, maxval=max_dy))))
            translations = (tx, ty)
        elif self.inv_translate is not None:
            translations = tuple(self.inv_translate)
        else:
            translations = (0, 0)
        if self.scale is not None:
            scale = float(jax.random.uniform(k4, (), minval=self.scale[0], maxval=self.scale[1]))
        elif self.inv_scale is not None:
            scale = self.inv_scale
        else:
            scale = 1.0
        shear_x = shear_y = 0.0
        if self.shear is not None:
            shear_x = float(jax.random.uniform(k5, (), minval=self.shear[0], maxval=self.shear[1]))
            if len(self.shear) == 4:
                shear_y = float(jax.random.uniform(k6, (), minval=self.shear[2], maxval=self.shear[3]))
        return angle, translations, scale, (shear_x, shear_y)

    def __call__(self, img, key):
        fill = self.fill
        if isinstance(fill, (int, float)):
            fill = [float(fill)] * 3          # same quirk as the original forward
        else:
            fill = [float(f) for f in fill]
        angle, translations, scale, shear = self.get_params(key, img.shape)
        # torchvision F.affine tensor path: center = [0, 0], inverted matrix.
        matrix = _get_inverse_affine_matrix(
            [0.0, 0.0], angle, [float(t) for t in translations], float(scale), shear)
        out = affine_nearest(img, matrix, fill, coef_bound=self._coef_bound)
        return out, translations, scale


# ---------------------------------- demo -------------------------------------

if __name__ == "__main__":
    key = jax.random.PRNGKey(0)
    k_img, k_img2, k_aff = jax.random.split(key, 3)

    # NCHW, C=3 so the module's "[fill]*3" quirk matches the channel count.
    x = jax.random.normal(k_img, (2, 3, 16, 16), dtype=jnp.float32)

    # 1) fixed-parameter checks against a pure-JAX reference gather, exercising
    #    the single-band path and the banded multi-k path.
    matrix = _get_inverse_affine_matrix([0.0, 0.0], 20.0, [2.0, -3.0], 0.9, (5.0, 0.0))
    fill = [0.5, -1.0, 2.0]
    ref = np.asarray(affine_nearest_ref(x, matrix, fill))
    out_a = jax.block_until_ready(affine_nearest(x, matrix, fill))            # tk=256
    out_b = jax.block_until_ready(affine_nearest(x, matrix, fill, tk=128))    # banded
    np.testing.assert_allclose(np.asarray(out_a), ref, atol=2e-2, rtol=0)
    np.testing.assert_allclose(np.asarray(out_b), ref, atol=2e-2, rtol=0)

    # 2) non-square shape: exercises H/W padding, multiple row tiles and bands.
    x2 = jax.random.normal(k_img2, (2, 3, 24, 40), dtype=jnp.float32)
    ref2 = np.asarray(affine_nearest_ref(x2, matrix, fill))
    out2 = jax.block_until_ready(affine_nearest(x2, matrix, fill, tk=128))
    np.testing.assert_allclose(np.asarray(out2), ref2, atol=2e-2, rtol=0)

    # 3) the full module forward (random params), like the PyTorch module;
    #    the band grid comes from the config-level worst case.
    module = MyRandomAffine(degrees=25.0, translate=(0.1, 0.1),
                            scale=(0.8, 1.2), shear=10.0, fill=0)
    out, translations, scale = module(x, k_aff)
    out = jax.block_until_ready(out)

    assert out.shape == x.shape and out.dtype == x.dtype
    assert bool(jnp.all(jnp.isfinite(out)))
    print("KERNEL_OK")
</pallas_src>

<mosaic_0001>
module attributes {stable_mosaic.version = 11 : i64} {
  func.func @_affine_gather_kernel(%arg0: i32, %arg1: i32, %arg2: memref<2xi32, #tpu.memory_space<smem>>, %arg3: memref<2xi32, #tpu.memory_space<smem>>, %arg4: memref<1x1024xi32, #tpu.memory_space<vmem>>, %arg5: memref<6x128xf32, #tpu.memory_space<vmem>>, %arg6: memref<6x256xbf16, #tpu.memory_space<vmem>>, %arg7: memref<6x1024xf32, #tpu.memory_space<vmem>>, %arg8: memref<6x1024xf32, #tpu.memory_space<vmem>>) attributes {dimension_semantics = [#tpu.dimension_semantics<parallel>, #tpu.dimension_semantics<arbitrary>], iteration_bounds = array<i64: 2, 1>, scalar_prefetch = 2 : i64, scratch_operands = 1 : i64, tpu.core_type = #tpu.core_type<tc>, window_params = [{transform_indices = @transform_0, window_bounds = array<i64: 1, 1024>}, {pipeline_mode = #tpu.pipeline_mode<synchronous>, transform_indices = @transform_1, window_bounds = array<i64: 6, 128>}, {transform_indices = @transform_2, window_bounds = array<i64: 6, 256>}, {transform_indices = @transform_3, window_bounds = array<i64: 6, 1024>}]} {
    %c0_i32 = arith.constant 0 : i32
    %0 = arith.cmpi eq, %arg1, %c0_i32 : i32
    %1 = arith.extui %0 : i1 to i32
    %c0_i32_0 = arith.constant 0 : i32
    %2 = arith.cmpi ne, %1, %c0_i32_0 : i32
    scf.if %2 {
      %cst = arith.constant 0.000000e+00 : f32
      %11 = vector.broadcast %cst : f32 to vector<6x1024xf32>
      %c0 = arith.constant 0 : index
      %c0_4 = arith.constant 0 : index
      %12 = vector.load %arg8[%c0, %c0_4] : memref<6x1024xf32, #tpu.memory_space<vmem>>, vector<6x1024xf32>
      tpu.vector_store %arg8[%c0, %c0_4], %11 {strides = array<i32>} : memref<6x1024xf32, #tpu.memory_space<vmem>>, vector<6x1024xf32>,
    } else {
    }
    %3 = arith.index_cast %arg0 : i32 to index
    %4 = memref.load %arg3[%3] : memref<2xi32, #tpu.memory_space<smem>>
    %5 = arith.cmpi slt, %arg1, %4 : i32
    %6 = arith.extui %5 : i1 to i32
    %c0_i32_1 = arith.constant 0 : i32
    %7 = arith.cmpi ne, %6, %c0_i32_1 : i32
    scf.if %7 {
      %11 = arith.index_cast %arg0 : i32 to index
      %12 = memref.load %arg2[%11] : memref<2xi32, #tpu.memory_space<smem>>
      %13 = arith.addi %12, %arg1 : i32
      %c256_i32 = arith.constant 256 : i32
      %14 = arith.muli %13, %c256_i32 : i32
      %15 = tpu.iota {dimensions = array<i32: 0>} : vector<256x1xi32>
      %16 = vector.broadcast %14 : i32 to vector<256x1xi32>
      %17 = arith.addi %16, %15 : vector<256x1xi32>
      %c0 = arith.constant 0 : index
      %c0_4 = arith.constant 0 : index
      %18 = vector.load %arg6[%c0, %c0_4] : memref<6x256xbf16, #tpu.memory_space<vmem>>, vector<6x256xbf16>
      %c0_5 = arith.constant 0 : index
      %c0_6 = arith.constant 0 : index
      %19 = vector.load %arg4[%c0_5, %c0_6] : memref<1x1024xi32, #tpu.memory_space<vmem>>, vector<1x256xi32>
      %20 = vector.broadcast %17 : vector<256x1xi32> to vector<256x256xi32>
      %21 = vector.broadcast %19 : vector<1x256xi32> to vector<256x256xi32>
      %22 = arith.cmpi eq, %20, %21 : vector<256x256xi32>
      %23 = arith.extui %22 : vector<256x256xi1> to vector<256x256xi32>
      %24 = arith.sitofp %23 : vector<256x256xi32> to vector<256x256xf32>
      %25 = arith.truncf %24 : vector<256x256xf32> to vector<256x256xbf16>
      %c0_7 = arith.constant 0 : index
      %c0_8 = arith.constant 0 : index
      %26 = vector.load %arg8[%c0_7, %c0_8] : memref<6x1024xf32, #tpu.memory_space<vmem>>, vector<6x256xf32>
      %cst = arith.constant dense<0.000000e+00> : vector<6x256xf32>
      %27 = tpu.matmul %18, %25, %cst {dimension_numbers = #tpu.dot_dimension_numbers<[1], [0], [0], [1], [0, 0, 1, 1], [], []>} : vector<6x256xbf16>, vector<256x256xbf16>, vector<6x256xf32> -> vector<6x256xf32>
      %28 = arith.addf %26, %27 : vector<6x256xf32>
      %c0_9 = arith.constant 0 : index
      %c0_10 = arith.constant 0 : index
      %29 = vector.load %arg8[%c0_9, %c0_10] : memref<6x1024xf32, #tpu.memory_space<vmem>>, vector<6x256xf32>
      tpu.vector_store %arg8[%c0_9, %c0_10], %28 {strides = array<i32>} : memref<6x1024xf32, #tpu.memory_space<vmem>>, vector<6x256xf32>,
      %c0_11 = arith.constant 0 : index
      %c256 = arith.constant 256 : index
      %30 = vector.load %arg4[%c0_11, %c256] : memref<1x1024xi32, #tpu.memory_space<vmem>>, vector<1x256xi32>
      %31 = vector.broadcast %17 : vector<256x1xi32> to vector<256x256xi32>
      %32 = vector.broadcast %30 : vector<1x256xi32> to vector<256x256xi32>
      %33 = arith.cmpi eq, %31, %32 : vector<256x256xi32>
      %34 = arith.extui %33 : vector<256x256xi1> to vector<256x256xi32>
      %35 = arith.sitofp %34 : vector<256x256xi32> to vector<256x256xf32>
      %36 = arith.truncf %35 : vector<256x256xf32> to vector<256x256xbf16>
      %c0_12 = arith.constant 0 : index
      %c256_13 = arith.constant 256 : index
      %37 = vector.load %arg8[%c0_12, %c256_13] : memref<6x1024xf32, #tpu.memory_space<vmem>>, vector<6x256xf32>
      %cst_14 = arith.constant dense<0.000000e+00> : vector<6x256xf32>
      %38 = tpu.matmul %18, %36, %cst_14 {dimension_numbers = #tpu.dot_dimension_numbers<[1], [0], [0], [1], [0, 0, 1, 1], [], []>} : vector<6x256xbf16>, vector<256x256xbf16>, vector<6x256xf32> -> vector<6x256xf32>
      %39 = arith.addf %37, %38 : vector<6x256xf32>
      %c0_15 = arith.constant 0 : index
      %c256_16 = arith.constant 256 : index
      %40 = vector.load %arg8[%c0_15, %c256_16] : memref<6x1024xf32, #tpu.memory_space<vmem>>, vector<6x256xf32>
      tpu.vector_store %arg8[%c0_15, %c256_16], %39 {strides = array<i32>} : memref<6x1024xf32, #tpu.memory_space<vmem>>, vector<6x256xf32>,
      %c0_17 = arith.constant 0 : index
      %c512 = arith.constant 512 : index
      %41 = vector.load %arg4[%c0_17, %c512] : memref<1x1024xi32, #tpu.memory_space<vmem>>, vector<1x256xi32>
      %42 = vector.broadcast %17 : vector<256x1xi32> to vector<256x256xi32>
      %43 = vector.broadcast %41 : vector<1x256xi32> to vector<256x256xi32>
      %44 = arith.cmpi eq, %42, %43 : vector<256x256xi32>
      %45 = arith.extui %44 : vector<256x256xi1> to vector<256x256xi32>
      %46 = arith.sitofp %45 : vector<256x256xi32> to vector<256x256xf32>
      %47 = arith.truncf %46 : vector<256x256xf32> to vector<256x256xbf16>
      %c0_18 = arith.constant 0 : index
      %c512_19 = arith.constant 512 : index
      %48 = vector.load %arg8[%c0_18, %c512_19] : memref<6x1024xf32, #tpu.memory_space<vmem>>, vector<6x256xf32>
      %cst_20 = arith.constant dense<0.000000e+00> : vector<6x256xf32>
      %49 = tpu.matmul %18, %47, %cst_20 {dimension_numbers = #tpu.dot_dimension_numbers<[1], [0], [0], [1], [0, 0, 1, 1], [], []>} : vector<6x256xbf16>, vector<256x256xbf16>, vector<6x256xf32> -> vector<6x256xf32>
      %50 = arith.addf %48, %49 : vector<6x256xf32>
      %c0_21 = arith.constant 0 : index
      %c512_22 = arith.constant 512 : index
      %51 = vector.load %arg8[%c0_21, %c512_22] : memref<6x1024xf32, #tpu.memory_space<vmem>>, vector<6x256xf32>
      tpu.vector_store %arg8[%c0_21, %c512_22], %50 {strides = array<i32>} : memref<6x1024xf32, #tpu.memory_space<vmem>>, vector<6x256xf32>,
      %c0_23 = arith.constant 0 : index
      %c768 = arith.constant 768 : index
      %52 = vector.load %arg4[%c0_23, %c768] : memref<1x1024xi32, #tpu.memory_space<vmem>>, vector<1x256xi32>
      %53 = vector.broadcast %17 : vector<256x1xi32> to vector<256x256xi32>
      %54 = vector.broadcast %52 : vector<1x256xi32> to vector<256x256xi32>
      %55 = arith.cmpi eq, %53, %54 : vector<256x256xi32>
      %56 = arith.extui %55 : vector<256x256xi1> to vector<256x256xi32>
      %57 = arith.sitofp %56 : vector<256x256xi32> to vector<256x256xf32>
      %58 = arith.truncf %57 : vector<256x256xf32> to vector<256x256xbf16>
      %c0_24 = arith.constant 0 : index
      %c768_25 = arith.constant 768 : index
      %59 = vector.load %arg8[%c0_24, %c768_25] : memref<6x1024xf32, #tpu.memory_space<vmem>>, vector<6x256xf32>
      %cst_26 = arith.constant dense<0.000000e+00> : vector<6x256xf32>
      %60 = tpu.matmul %18, %58, %cst_26 {dimension_numbers = #tpu.dot_dimension_numbers<[1], [0], [0], [1], [0, 0, 1, 1], [], []>} : vector<6x256xbf16>, vector<256x256xbf16>, vector<6x256xf32> -> vector<6x256xf32>
      %61 = arith.addf %59, %60 : vector<6x256xf32>
      %c0_27 = arith.constant 0 : index
      %c768_28 = arith.constant 768 : index
      %62 = vector.load %arg8[%c0_27, %c768_28] : memref<6x1024xf32, #tpu.memory_space<vmem>>, vector<6x256xf32>
      tpu.vector_store %arg8[%c0_27, %c768_28], %61 {strides = array<i32>} : memref<6x1024xf32, #tpu.memory_space<vmem>>, vector<6x256xf32>,
    } else {
    }
    %c0_i32_2 = arith.constant 0 : i32
    %8 = arith.cmpi eq, %arg1, %c0_i32_2 : i32
    %9 = arith.extui %8 : i1 to i32
    %c0_i32_3 = arith.constant 0 : i32
    %10 = arith.cmpi ne, %9, %c0_i32_3 : i32
    scf.if %10 {
      %c0 = arith.constant 0 : index
      %c0_4 = arith.constant 0 : index
      %11 = vector.load %arg4[%c0, %c0_4] : memref<1x1024xi32, #tpu.memory_space<vmem>>, vector<1x1024xi32>
      %c0_i32_5 = arith.constant 0 : i32
      %12 = vector.broadcast %c0_i32_5 : i32 to vector<1x1024xi32>
      %13 = arith.cmpi slt, %11, %12 : vector<1x1024xi32>
      %c0_6 = arith.constant 0 : index
      %c0_7 = arith.constant 0 : index
      %14 = vector.load %arg5[%c0_6, %c0_7] : memref<6x128xf32, #tpu.memory_space<vmem>>, vector<6x1xf32>
      %c0_8 = arith.constant 0 : index
      %c0_9 = arith.constant 0 : index
      %15 = vector.load %arg8[%c0_8, %c0_9] : memref<6x1024xf32, #tpu.memory_space<vmem>>, vector<6x1024xf32>
      %16 = vector.shape_cast %13 : vector<1x1024xi1> to vector<1x1024xi1>
      %17 = vector.broadcast %16 : vector<1x1024xi1> to vector<6x1024xi1>
      %18 = vector.shape_cast %14 : vector<6x1xf32> to vector<6x1xf32>
      %19 = vector.broadcast %18 : vector<6x1xf32> to vector<6x1024xf32>
      %20 = arith.select %17, %19, %15 : vector<6x1024xi1>, vector<6x1024xf32>
      %c0_10 = arith.constant 0 : index
      %c0_11 = arith.constant 0 : index
      %21 = vector.load %arg7[%c0_10, %c0_11] : memref<6x1024xf32, #tpu.memory_space<vmem>>, vector<6x1024xf32>
      tpu.vector_store %arg7[%c0_10, %c0_11], %20 {strides = array<i32>} : memref<6x1024xf32, #tpu.memory_space<vmem>>, vector<6x1024xf32>,
    } else {
    }
    return
  }
  func.func @transform_0(%arg0: i32, %arg1: i32, %arg2: memref<2xi32, #tpu.memory_space<smem>>, %arg3: memref<2xi32, #tpu.memory_space<smem>>) -> (i32, i32) {
    %c0_i32 = arith.constant 0 : i32
    %c0_i32_0 = arith.constant 0 : i32
    return %c0_i32, %arg0 : i32, i32
  }
  func.func @transform_1(%arg0: i32, %arg1: i32, %arg2: memref<2xi32, #tpu.memory_space<smem>>, %arg3: memref<2xi32, #tpu.memory_space<smem>>) -> (i32, i32) {
    %c0_i32 = arith.constant 0 : i32
    %c0_i32_0 = arith.constant 0 : i32
    %c0_i32_1 = arith.constant 0 : i32
    return %c0_i32, %c0_i32_0 : i32, i32
  }
  func.func @transform_2(%arg0: i32, %arg1: i32, %arg2: memref<2xi32, #tpu.memory_space<smem>>, %arg3: memref<2xi32, #tpu.memory_space<smem>>) -> (i32, i32) {
    %0 = arith.index_cast %arg0 : i32 to index
    %1 = memref.load %arg2[%0] : memref<2xi32, #tpu.memory_space<smem>>
    %2 = arith.index_cast %arg0 : i32 to index
    %3 = memref.load %arg3[%2] : memref<2xi32, #tpu.memory_space<smem>>
    %c1_i32 = arith.constant 1 : i32
    %4 = arith.maxsi %3, %c1_i32 : i32
    %5 = arith.addi %1, %4 : i32
    %c1_i32_0 = arith.constant 1 : i32
    %6 = arith.subi %5, %c1_i32_0 : i32
    %7 = arith.index_cast %arg0 : i32 to index
    %8 = memref.load %arg2[%7] : memref<2xi32, #tpu.memory_space<smem>>
    %9 = arith.addi %8, %arg1 : i32
    %10 = arith.minsi %9, %6 : i32
    %c0_i32 = arith.constant 0 : i32
    %c0_i32_1 = arith.constant 0 : i32
    return %c0_i32, %10 : i32, i32
  }
  func.func @transform_3(%arg0: i32, %arg1: i32, %arg2: memref<2xi32, #tpu.memory_space<smem>>, %arg3: memref<2xi32, #tpu.memory_space<smem>>) -> (i32, i32) {
    %c0_i32 = arith.constant 0 : i32
    %c0_i32_0 = arith.constant 0 : i32
    return %c0_i32, %arg0 : i32, i32
  }
}

</mosaic_0001>

<llo_original>
// kernel: tpu_custom_call.1
$region0: #{tpu_custom_call.1}
  #allocation0 [shape = 'u32[]', space=smem, size = 0x4, offset = 0x4, fixed_abs, tag = 'smem constant byte address 0x4 - core index']
  #allocation1 [shape = 'u32[144,128]{1,0:T(1,128)}', space=vmem, size = 0x12000, scoped, tag = 'internal scratch']
  #allocation2 [shape = 'f32[6,1024]{1,0:T(8,128)}', space=vmem, size = 0x8000, scoped, tag = 'scratch operand']
  #allocation3 [shape = 's32[1]{0}', space=sflag, size = 0x4, scoped, tag = 'scoped memory for tpu_custom_call.1']
  #allocation4 [shape = 'u8[512]{0}', space=smem, size = 0x200, scoped, tag = 'prefetched SMEM operand 0']
  #allocation5 [shape = 'u8[512]{0}', space=smem, size = 0x200, scoped, tag = 'prefetched SMEM operand 1']
  %s0 = inlined_call_operand.hbm [shape: s32[2], index: 0, kind: input, shape index: {}]
  %s1 = inlined_call_operand.vmem [shape: s32[2], index: 1, kind: input, shape index: {}]
  %s2 = inlined_call_operand.hbm [shape: s32[1,2048], index: 2, kind: input, shape index: {}]
  %s3 = inlined_call_operand.vmem [shape: f32[6,128], index: 3, kind: input, shape index: {}]
  %s4 = inlined_call_operand.hbm [shape: bf16[6,256], index: 4, kind: input, shape index: {}]
  %s5 = inlined_call_operand.hbm [shape: f32[6,2048], index: 5, kind: output, shape index: {}]
  %s6 = sld [smem:[#allocation0]]
  $region65: #{tpu_custom_call.1} parent=0
    _
  %s8 = ssub.s32 1, %s6
  %s9 = scalar_select 0, %s8, %s6
  %11 = dma.hbm_to_smem %s0, 16, [#allocation4], [#allocation3]
  %s12 = sshll.u32 %s1, 4
  %s13 = int_to_ptr.vmem [resolvable:$true] %s12
  %15 = dma.vmem_to_smem %s13, 16, [#allocation5], [#allocation3]
  %16 = dma.done [#allocation3], 32
  %17 = sfence
  $region1: #{tpu_custom_call.1} parent=0
    #allocation6 [shape = 'u8[8192]{0}', space=vmem, size = 0x2000, scoped, tag = 'input window, operand 2']
    #allocation7 [shape = 's32[2]{0}', space=sflag, size = 0x8, scoped, tag = 'scoped memory for tpu_custom_call.1']
    #allocation8 [shape = 's32[2]{0}', space=sflag, size = 0x8, scoped, tag = 'scoped memory for tpu_custom_call.1']
    #allocation9 [shape = 'u8[8192]{0}', space=vmem, size = 0x2000, scoped, tag = 'input window, operand 4']
    #allocation10 [shape = 's32[2]{0}', space=sflag, size = 0x8, scoped, tag = 'scoped memory for tpu_custom_call.1']
    #allocation11 [shape = 'u8[65536]{0}', space=vmem, size = 0x10000, scoped, tag = 'output window, operand 0']
    %18 = vsyncpa [#allocation7], 0
    %s19 = scalar_lea.sflag [#allocation7], 1
    %20 = vsyncpa %s19, 0
    %21 = vsyncpa [#allocation10], 0
    %s22 = scalar_lea.sflag [#allocation10], 1
    %23 = vsyncpa %s22, 0
    %24 = vsyncpa [#allocation8], 0
    %s25 = scalar_lea.sflag [#allocation8], 1
    %26 = vsyncpa %s25, 0
    loop: start=0, step=1, limit=4
    $region2: #{tpu_custom_call.1} parent=1 // loop_pre_header
      _
    $region3: #{tpu_custom_call.1} parent=1 // loop_header
      %s28 = sphi 0, %s32
      %p29 = scmp.ge.s32.totalorder %s28, 4
      %s35 = sphi 0, %s47
      %s36 = sphi 0, %s43
      %s37 = sphi 0, %s35
      %s38 = sphi 0, %s36
      %s39 = sphi 0, %s37
      %s40 = sphi 0, %s38
      %s50 = sphi 0, %s52
      %s53 = sphi 0, %s50
      %s54 = sphi 0, %s53
      %s70 = sphi 0, %s54
      %s74 = sphi 0, %s74
      %s76 = sphi 0, %s74
      %s77 = sphi 0, %s76
      %s91 = sphi 0, %s77
      %s115 = sphi 0, %s117
      %s118 = sphi 0, %s115
      %s119 = sphi 0, %s118
      %s135 = sphi 0, %s119
      %s141 = sphi 0, %s143
      %s144 = sphi 0, %s141
      %s145 = sphi 0, %s144
      %s161 = sphi 0, %s145
    $region4: #{tpu_custom_call.1} parent=1 // loop_header_branch
      %31 = sbr.rel (%p29) target = $region8
    $region5: #{tpu_custom_call.1} parent=1 // loop_body
      %s33 = ssub.s32 %s28, 1
      %s34 = ssub.s32 %s28, 2
      %s41 = sadd.s32 1, %s36
      %p42 = scmp.ge.s32.totalorder %s41, 1
      %s43 = scalar_select %p42, 0, %s41
      %s44 = sadd.s32 1, %s35
      %s45 = scalar_select %p42, %s44, %s35
      %p46 = scmp.ge.s32.totalorder %s45, 2
      %s47 = scalar_select %p46, 0, %s45
      %s48 = ssub.s32 %s35, %s47
      %p49 = scmp.eq.s32.totalorder %s48, 0
      %s51 = sadd.s32 %s50, 1
      %s52 = scalar_select %p49, %s50, %s51
      %p55 = pneg %p49
      %p56 = scmp.eq.s32.totalorder %s28, 1
      %p57 = por %p55, %p56
      %p58 = scmp.ne.s32.totalorder %s50, %s53
      %p59 = scmp.eq.s32.totalorder %s28, 0
      %p60 = por %p58, %p59
      %p61 = scmp.ne.s32.totalorder %s50, %s53
      %p62 = scmp.eq.s32.totalorder %s33, 1
      %p63 = por %p61, %p62
      %p64 = scmp.ne.s32.totalorder %s53, %s54
      %p65 = scmp.eq.s32.totalorder %s33, 0
      %p66 = por %p64, %p65
      %p67 = scmp.ne.s32.totalorder %s53, %s54
      %p68 = scmp.eq.s32.totalorder %s34, 1
      %p69 = por %p67, %p68
      %p71 = scmp.ne.s32.totalorder %s54, %s70
      %p72 = scmp.eq.s32.totalorder %s34, 0
      %p73 = por %p71, %p72
      %s75 = sadd.s32 %s74, 1
      %p78 = scmp.eq.s32.totalorder %s28, 1
      %p79 = scmp.ne.s32.totalorder %s74, %s76
      %p80 = scmp.eq.s32.totalorder %s28, 0
      %p81 = por %p79, %p80
      %p82 = scmp.ne.s32.totalorder %s74, %s76
      %p83 = scmp.eq.s32.totalorder %s33, 1
      %p84 = por %p82, %p83
      %p85 = scmp.ne.s32.totalorder %s76, %s77
      %p86 = scmp.eq.s32.totalorder %s33, 0
      %p87 = por %p85, %p86
      %p88 = scmp.ne.s32.totalorder %s76, %s77
      %p89 = scmp.eq.s32.totalorder %s34, 1
      %p90 = por %p88, %p89
      %p92 = scmp.ne.s32.totalorder %s77, %s91
      %p93 = scmp.eq.s32.totalorder %s34, 0
      %p94 = por %p92, %p93
      %s95 = sld [smem:[#allocation4 + %s35]]
      %s96 = sld [smem:[#allocation5 + %s35]]
      %p97 = scmp.gt.s32.totalorder %s96, 1
      %s98 = scalar_select %p97, %s96, 1
      %s99 = sadd.s32 %s95, %s98
      %s100 = ssub.s32 %s99, 1
      %s101 = sadd.s32 %s95, %s36
      %p102 = scmp.lt.s32.totalorder %s101, %s100
      %s103 = scalar_select %p102, %s101, %s100
      %s104 = sld [smem:[#allocation4 + %s47]]
      %s105 = sld [smem:[#allocation5 + %s47]]
      %p106 = scmp.gt.s32.totalorder %s105, 1
      %s107 = scalar_select %p106, %s105, 1
      %s108 = sadd.s32 %s104, %s107
      %s109 = ssub.s32 %s108, 1
      %s110 = sadd.s32 %s104, %s43
      %p111 = scmp.lt.s32.totalorder %s110, %s109
      %s112 = scalar_select %p111, %s110, %s109
      %s113 = ssub.s32 %s103, %s112
      %p114 = scmp.eq.s32.totalorder %s113, 0
      %s116 = sadd.s32 %s115, 1
      %s117 = scalar_select %p114, %s115, %s116
      %p120 = pneg %p114
      %p121 = scmp.eq.s32.totalorder %s28, 1
      %p122 = por %p120, %p121
      %p123 = scmp.ne.s32.totalorder %s115, %s118
      %p124 = scmp.eq.s32.totalorder %s28, 0
      %p125 = por %p123, %p124
      %p126 = scmp.ne.s32.totalorder %s115, %s118
      %p127 = scmp.eq.s32.totalorder %s33, 1
      %p128 = por %p126, %p127
      %p129 = scmp.ne.s32.totalorder %s118, %s119
      %p130 = scmp.eq.s32.totalorder %s33, 0
      %p131 = por %p129, %p130
      %p132 = scmp.ne.s32.totalorder %s118, %s119
      %p133 = scmp.eq.s32.totalorder %s34, 1
      %p134 = por %p132, %p133
      %p136 = scmp.ne.s32.totalorder %s119, %s135
      %p137 = scmp.eq.s32.totalorder %s34, 0
      %p138 = por %p136, %p137
      %s139 = ssub.s32 %s35, %s47
      %p140 = scmp.eq.s32.totalorder %s139, 0
      %s142 = sadd.s32 %s141, 1
      %s143 = scalar_select %p140, %s141, %s142
      %p146 = pneg %p140
      %p147 = scmp.eq.s32.totalorder %s28, 1
      %p148 = por %p146, %p147
      %p149 = scmp.ne.s32.totalorder %s141, %s144
      %p150 = scmp.eq.s32.totalorder %s28, 0
      %p151 = por %p149, %p150
      %p152 = scmp.ne.s32.totalorder %s141, %s144
      %p153 = scmp.eq.s32.totalorder %s33, 1
      %p154 = por %p152, %p153
      %p155 = scmp.ne.s32.totalorder %s144, %s145
      %p156 = scmp.eq.s32.totalorder %s33, 0
      %p157 = por %p155, %p156
      %p158 = scmp.ne.s32.totalorder %s144, %s145
      %p159 = scmp.eq.s32.totalorder %s34, 1
      %p160 = por %p158, %p159
      %p162 = scmp.ne.s32.totalorder %s145, %s161
      %p163 = scmp.eq.s32.totalorder %s34, 0
      %p164 = por %p162, %p163
      %p165 = scmp.le.s32.totalorder 1, %s28
      %p166 = scmp.lt.s32.totalorder %s28, 3
      %p167 = pnand %p165, %p166
      %p168 = pneg %p167
      // Predicated region
      $region9: #{tpu_custom_call.1} parent=5 // pred_check
        _
      $region10: #{tpu_custom_call.1} parent=5 // pred_check_branch
        %170 = sbr.rel (%p167) target = $region12
      $region11: #{tpu_custom_call.1} parent=5 // pred_region
        %s171 = ssub.s32 %s28, 1
        // Predicated region
        $region13: #{tpu_custom_call.1} parent=11 // pred_check
          %p172 = pneg %p87
        $region14: #{tpu_custom_call.1} parent=11 // pred_check_branch
          %174 = sbr.rel (%p172) target = $region16
        $region15: #{tpu_custom_call.1} parent=11 // pred_region
          _
        $region16: #{tpu_custom_call.1} parent=11 // pred_fallthru
          _
      $region12: #{tpu_custom_call.1} parent=5 // pred_fallthru
        _
      %p175 = scmp.lt.s32.totalorder %s28, 2
      // Predicated region
      $region17: #{tpu_custom_call.1} parent=5 // pred_check
        %p176 = pneg %p175
      $region18: #{tpu_custom_call.1} parent=5 // pred_check_branch
        %178 = sbr.rel (%p176) target = $region20
      $region19: #{tpu_custom_call.1} parent=5 // pred_region
        // Predicated region
        $region21: #{tpu_custom_call.1} parent=19 // pred_check
          %p179 = pneg %p60
        $region22: #{tpu_custom_call.1} parent=19 // pred_check_branch
          %181 = sbr.rel (%p179) target = $region24
        $region23: #{tpu_custom_call.1} parent=19 // pred_region
          %s182 = sand.u32 %s50, 1
          %s183 = scalar_lea.sflag [#allocation7], %s182
          %s184 = sand.u32 %s50, 1
          %s185 = smul.addr %s184, 8
          %s186 = scalar_lea.vmem [#allocation6], %s185
          %s187 = smul.u32 8, %s35
          %s189 = ssub.s32 128, 128
          %190 = vsyncadd %s183, %s189
          %s191 = smul.addr %s187, 16
          %s192 = scalar_lea.hbm %s2, %s191
          %s194 = sshll.u32 %s186, 4
          %s195 = int_to_ptr.vmem [resolvable:$true] %s194
          %197 = dma.hbm_to_vmem [thread:$0]  %s192, 128, %s195, %s183
        $region24: #{tpu_custom_call.1} parent=19 // pred_fallthru
          _
        // Predicated region
        $region25: #{tpu_custom_call.1} parent=19 // pred_check
          %p198 = pneg %p125
        $region26: #{tpu_custom_call.1} parent=19 // pred_check_branch
          %200 = sbr.rel (%p198) target = $region28
        $region27: #{tpu_custom_call.1} parent=19 // pred_region
          %s201 = sand.u32 %s115, 1
          %s202 = scalar_lea.sflag [#allocation10], %s201
          %s203 = sand.u32 %s115, 1
          %s204 = smul.addr %s203, 8
          %s205 = scalar_lea.vmem [#allocation9], %s204
          %s206 = sld [smem:[#allocation4 + %s35]]
          %s207 = sld [smem:[#allocation5 + %s35]]
          %p208 = scmp.gt.s32.totalorder %s207, 1
          %s209 = scalar_select %p208, %s207, 1
          %s210 = sadd.s32 %s206, %s209
          %s211 = ssub.s32 %s210, 1
          %s212 = sadd.s32 %s206, %s36
          %p213 = scmp.lt.s32.totalorder %s212, %s211
          %s214 = scalar_select %p213, %s212, %s211
          %s215 = smul.u32 2, %s214
          %s217 = ssub.s32 128, 128
          %218 = vsyncadd %s202, %s217
          %s219 = smul.addr %s215, 64
          %s220 = scalar_lea.hbm %s4, %s219
          %s222 = sshll.u32 %s205, 4
          %s223 = int_to_ptr.vmem [resolvable:$true] %s222
          %225 = dma.hbm_to_vmem [thread:$0]  %s220, 128, %s223, %s202
        $region28: #{tpu_custom_call.1} parent=19 // pred_fallthru
          _
      $region20: #{tpu_custom_call.1} parent=5 // pred_fallthru
        _
      %p226 = scmp.le.s32.totalorder 1, %s28
      %p227 = scmp.lt.s32.totalorder %s28, 3
      %p228 = pnand %p226, %p227
      %p229 = pneg %p228
      // Predicated region
      $region29: #{tpu_custom_call.1} parent=5 // pred_check
        _
      $region30: #{tpu_custom_call.1} parent=5 // pred_check_branch
        %231 = sbr.rel (%p228) target = $region32
      $region31: #{tpu_custom_call.1} parent=5 // pred_region
        %s232 = ssub.s32 %s28, 1
        %s233 = sand.u32 %s53, 1
        %s234 = scalar_lea.sflag [#allocation7], %s233
        %s235 = sand.u32 %s53, 1
        %s236 = smul.addr %s235, 8
        %s237 = scalar_lea.vmem [#allocation6], %s236
        // Predicated region
        $region33: #{tpu_custom_call.1} parent=31 // pred_check
          %p238 = pneg %p66
        $region34: #{tpu_custom_call.1} parent=31 // pred_check_branch
          %240 = sbr.rel (%p238) target = $region36
        $region35: #{tpu_custom_call.1} parent=31 // pred_region
          %241 = dma.done %s234, 128
        $region36: #{tpu_custom_call.1} parent=31 // pred_fallthru
          _
        %s242 = sand.u32 %s118, 1
        %s243 = scalar_lea.sflag [#allocation10], %s242
        %s244 = sand.u32 %s118, 1
        %s245 = smul.addr %s244, 8
        %s246 = scalar_lea.vmem [#allocation9], %s245
        // Predicated region
        $region37: #{tpu_custom_call.1} parent=31 // pred_check
          %p247 = pneg %p131
        $region38: #{tpu_custom_call.1} parent=31 // pred_check_branch
          %249 = sbr.rel (%p247) target = $region40
        $region39: #{tpu_custom_call.1} parent=31 // pred_region
          %250 = dma.done %s243, 128
        $region40: #{tpu_custom_call.1} parent=31 // pred_fallthru
          _
        %s251 = sand.u32 %s53, 1
        %s252 = scalar_lea.sflag [#allocation7], %s251
        %s253 = sand.u32 %s53, 1
        %s254 = smul.addr %s253, 8
        %s255 = scalar_lea.vmem [#allocation6], %s254
        %p256 = pneg %p66
        %p257 = pneg %p63
        %p258 = pneg %p87
        %p259 = pneg %p84
        %s260 = sand.u32 %s118, 1
        %s261 = scalar_lea.sflag [#allocation10], %s260
        %s262 = sand.u32 %s118, 1
        %s263 = smul.addr %s262, 8
        %s264 = scalar_lea.vmem [#allocation9], %s263
        %p265 = pneg %p131
        %p266 = pneg %p128
        %p267 = pneg %p157
        %p268 = pneg %p154
        %s269 = sand.u32 %s144, 1
        %s270 = scalar_lea.sflag [#allocation8], %s269
        %s271 = sand.u32 %s144, 1
        %s272 = smul.addr %s271, 64
        %s273 = scalar_lea.vmem [#allocation11], %s272
        %s274 = smul.u32 8, %s37
        %s275 = sld [smem:[#allocation4 + %s37]]
        %s276 = sld [smem:[#allocation5 + %s37]]
        %p277 = scmp.gt.s32.totalorder %s276, 1
        %s278 = scalar_select %p277, %s276, 1
        %s279 = sadd.s32 %s275, %s278
        %s280 = ssub.s32 %s279, 1
        %s281 = sadd.s32 %s275, %s38
        %p282 = scmp.lt.s32.totalorder %s281, %s280
        %s283 = scalar_select %p282, %s281, %s280
        %s284 = smul.u32 2, %s283
        %s285 = smul.u32 8, %s37
        %p286 = scmp.eq.s32.totalorder %s38, 0
        // Predicated region
        $region41: #{tpu_custom_call.1} parent=31 // pred_check
          %p287 = pneg %p286
        $region42: #{tpu_custom_call.1} parent=31 // pred_check_branch
          %289 = sbr.rel (%p287) target = $region44
        $region43: #{tpu_custom_call.1} parent=31 // pred_region
          %290 = vst [vmem:[#allocation2] sm:$0x3f] 0.0
          %291 = vst [vmem:[#allocation2 + $0x8] sm:$0x3f] 0.0
          %292 = vst [vmem:[#allocation2 + $0x10] sm:$0x3f] 0.0
          %293 = vst [vmem:[#allocation2 + $0x18] sm:$0x3f] 0.0
          %294 = vst [vmem:[#allocation2 + $0x20] sm:$0x3f] 0.0
          %295 = vst [vmem:[#allocation2 + $0x28] sm:$0x3f] 0.0
          %296 = vst [vmem:[#allocation2 + $0x30] sm:$0x3f] 0.0
          %297 = vst [vmem:[#allocation2 + $0x38] sm:$0x3f] 0.0
        $region44: #{tpu_custom_call.1} parent=31 // pred_fallthru
          _
        %s298 = sld [smem:[#allocation5 + %s37]]
        %p299 = scmp.lt.s32.totalorder %s38, %s298
        // Predicated region
        $region45: #{tpu_custom_call.1} parent=31 // pred_check
          %p300 = pneg %p299
        $region46: #{tpu_custom_call.1} parent=31 // pred_check_branch
          %302 = sbr.rel (%p300) target = $region48
        $region47: #{tpu_custom_call.1} parent=31 // pred_region
          %s303 = sld [smem:[#allocation4 + %s37]]
          %s304 = sadd.s32 %s303, %s38
          %s305 = smul.u32 %s304, 256
          %v306 = vlaneseq
          %v307 = vshrl.u32 %v306, 7
          %v308 = vadd.s32 %v307, 8
          %v309 = vadd.s32 %v307, 16
          %v310 = vadd.s32 %v307, 24
          %v311 = vadd.s32 %v307, 32
          %v312 = vadd.s32 %v307, 40
          %v313 = vadd.s32 %v307, 48
          %v314 = vadd.s32 %v307, 56
          %v315 = vadd.s32 %v307, 64
          %v316 = vadd.s32 %v307, 72
          %v317 = vadd.s32 %v307, 80
          %v318 = vadd.s32 %v307, 88
          %v319 = vadd.s32 %v307, 96
          %v320 = vadd.s32 %v307, 104
          %v321 = vadd.s32 %v307, 112
          %v322 = vadd.s32 %v307, 120
          %v323 = vadd.s32 %v307, 128
          %v324 = vadd.s32 %v307, 136
          %v325 = vadd.s32 %v307, 144
          %v326 = vadd.s32 %v307, 152
          %v327 = vadd.s32 %v307, 160
          %v328 = vadd.s32 %v307, 168
          %v329 = vadd.s32 %v307, 176
          %v330 = vadd.s32 %v307, 184
          %v331 = vadd.s32 %v307, 192
          %v332 = vadd.s32 %v307, 200
          %v333 = vadd.s32 %v307, 208
          %v334 = vadd.s32 %v307, 216
          %v335 = vadd.s32 %v307, 224
          %v336 = vadd.s32 %v307, 232
          %v337 = vadd.s32 %v307, 240
          %v338 = vadd.s32 %v307, 248
          %v339 = vstv %s305
          %v340 = vadd.s32 %v339, %v307
          %v341 = vadd.s32 %v339, %v308
          %v342 = vadd.s32 %v339, %v309
          %v343 = vadd.s32 %v339, %v310
          %v344 = vadd.s32 %v339, %v311
          %v345 = vadd.s32 %v339, %v312
          %v346 = vadd.s32 %v339, %v313
          %v347 = vadd.s32 %v339, %v314
          %v348 = vadd.s32 %v339, %v315
          %v349 = vadd.s32 %v339, %v316
          %v350 = vadd.s32 %v339, %v317
          %v351 = vadd.s32 %v339, %v318
          %v352 = vadd.s32 %v339, %v319
          %v353 = vadd.s32 %v339, %v320
          %v354 = vadd.s32 %v339, %v321
          %v355 = vadd.s32 %v339, %v322
          %v356 = vadd.s32 %v339, %v323
          %v357 = vadd.s32 %v339, %v324
          %v358 = vadd.s32 %v339, %v325
          %v359 = vadd.s32 %v339, %v326
          %v360 = vadd.s32 %v339, %v327
          %v361 = vadd.s32 %v339, %v328
          %v362 = vadd.s32 %v339, %v329
          %v363 = vadd.s32 %v339, %v330
          %v364 = vadd.s32 %v339, %v331
          %v365 = vadd.s32 %v339, %v332
          %v366 = vadd.s32 %v339, %v333
          %v367 = vadd.s32 %v339, %v334
          %v368 = vadd.s32 %v339, %v335
          %v369 = vadd.s32 %v339, %v336
          %v370 = vadd.s32 %v339, %v337
          %v371 = vadd.s32 %v339, %v338
          %v372 = vld [vmem:[%s246] sm:$0x77]
          %v373 = vld [vmem:[%s237] sm:$0x3]
          %v374 = vlaneseq
          %v375 = vshrl.u32 %v374, 7
          %v376 = vsub.s32 0, %v375
          %v377 = vrot.slane %v373, %v376
          %v378 = vlaneseq
          %v379 = vshrl.u32 %v378, 7
          %v380 = vsub.s32 1, %v379
          %v381 = vrot.slane %v373, %v380
          %vm382 = vcmp.eq.s32.totalorder %v340, %v377
          %vm383 = vcmp.eq.s32.totalorder %v340, %v381
          %vm384 = vcmp.eq.s32.totalorder %v341, %v377
          %vm385 = vcmp.eq.s32.totalorder %v341, %v381
          %vm386 = vcmp.eq.s32.totalorder %v342, %v377
          %vm387 = vcmp.eq.s32.totalorder %v342, %v381
          %vm388 = vcmp.eq.s32.totalorder %v343, %v377
          %vm389 = vcmp.eq.s32.totalorder %v343, %v381
          %vm390 = vcmp.eq.s32.totalorder %v344, %v377
          %vm391 = vcmp.eq.s32.totalorder %v344, %v381
          %vm392 = vcmp.eq.s32.totalorder %v345, %v377
          %vm393 = vcmp.eq.s32.totalorder %v345, %v381
          %vm394 = vcmp.eq.s32.totalorder %v346, %v377
          %vm395 = vcmp.eq.s32.totalorder %v346, %v381
          %vm396 = vcmp.eq.s32.totalorder %v347, %v377
          %vm397 = vcmp.eq.s32.totalorder %v347, %v381
          %vm398 = vcmp.eq.s32.totalorder %v348, %v377
          %vm399 = vcmp.eq.s32.totalorder %v348, %v381
          %vm400 = vcmp.eq.s32.totalorder %v349, %v377
          %vm401 = vcmp.eq.s32.totalorder %v349, %v381
          %vm402 = vcmp.eq.s32.totalorder %v350, %v377
          %vm403 = vcmp.eq.s32.totalorder %v350, %v381
          %vm404 = vcmp.eq.s32.totalorder %v351, %v377
          %vm405 = vcmp.eq.s32.totalorder %v351, %v381
          %vm406 = vcmp.eq.s32.totalorder %v352, %v377
          %vm407 = vcmp.eq.s32.totalorder %v352, %v381
          %vm408 = vcmp.eq.s32.totalorder %v353, %v377
          %vm409 = vcmp.eq.s32.totalorder %v353, %v381
          %vm410 = vcmp.eq.s32.totalorder %v354, %v377
          %vm411 = vcmp.eq.s32.totalorder %v354, %v381
          %vm412 = vcmp.eq.s32.totalorder %v355, %v377
          %vm413 = vcmp.eq.s32.totalorder %v355, %v381
          %vm414 = vcmp.eq.s32.totalorder %v356, %v377
          %vm415 = vcmp.eq.s32.totalorder %v356, %v381
          %vm416 = vcmp.eq.s32.totalorder %v357, %v377
          %vm417 = vcmp.eq.s32.totalorder %v357, %v381
          %vm418 = vcmp.eq.s32.totalorder %v358, %v377
          %vm419 = vcmp.eq.s32.totalorder %v358, %v381
          %vm420 = vcmp.eq.s32.totalorder %v359, %v377
          %vm421 = vcmp.eq.s32.totalorder %v359, %v381
          %vm422 = vcmp.eq.s32.totalorder %v360, %v377
          %vm423 = vcmp.eq.s32.totalorder %v360, %v381
          %vm424 = vcmp.eq.s32.totalorder %v361, %v377
          %vm425 = vcmp.eq.s32.totalorder %v361, %v381
          %vm426 = vcmp.eq.s32.totalorder %v362, %v377
          %vm427 = vcmp.eq.s32.totalorder %v362, %v381
          %vm428 = vcmp.eq.s32.totalorder %v363, %v377
          %vm429 = vcmp.eq.s32.totalorder %v363, %v381
          %vm430 = vcmp.eq.s32.totalorder %v364, %v377
          %vm431 = vcmp.eq.s32.totalorder %v364, %v381
          %vm432 = vcmp.eq.s32.totalorder %v365, %v377
          %vm433 = vcmp.eq.s32.totalorder %v365, %v381
          %vm434 = vcmp.eq.s32.totalorder %v366, %v377
          %vm435 = vcmp.eq.s32.totalorder %v366, %v381
          %vm436 = vcmp.eq.s32.totalorder %v367, %v377
          %vm437 = vcmp.eq.s32.totalorder %v367, %v381
          %vm438 = vcmp.eq.s32.totalorder %v368, %v377
          %vm439 = vcmp.eq.s32.totalorder %v368, %v381
          %vm440 = vcmp.eq.s32.totalorder %v369, %v377
          %vm441 = vcmp.eq.s32.totalorder %v369, %v381
          %vm442 = vcmp.eq.s32.totalorder %v370, %v377
          %vm443 = vcmp.eq.s32.totalorder %v370, %v381
          %vm444 = vcmp.eq.s32.totalorder %v371, %v377
          %vm445 = vcmp.eq.s32.totalorder %v371, %v381
          %v446 = vsel %vm382, 1, 0
          %v447 = vsel %vm383, 1, 0
          %v448 = vsel %vm384, 1, 0
          %v449 = vsel %vm385, 1, 0
          %v450 = vsel %vm386, 1, 0
          %v451 = vsel %vm387, 1, 0
          %v452 = vsel %vm388, 1, 0
          %v453 = vsel %vm389, 1, 0
          %v454 = vsel %vm390, 1, 0
          %v455 = vsel %vm391, 1, 0
          %v456 = vsel %vm392, 1, 0
          %v457 = vsel %vm393, 1, 0
          %v458 = vsel %vm394, 1, 0
          %v459 = vsel %vm395, 1, 0
          %v460 = vsel %vm396, 1, 0
          %v461 = vsel %vm397, 1, 0
          %v462 = vsel %vm398, 1, 0
          %v463 = vsel %vm399, 1, 0
          %v464 = vsel %vm400, 1, 0
          %v465 = vsel %vm401, 1, 0
          %v466 = vsel %vm402, 1, 0
          %v467 = vsel %vm403, 1, 0
          %v468 = vsel %vm404, 1, 0
          %v469 = vsel %vm405, 1, 0
          %v470 = vsel %vm406, 1, 0
          %v471 = vsel %vm407, 1, 0
          %v472 = vsel %vm408, 1, 0
          %v473 = vsel %vm409, 1, 0
          %v474 = vsel %vm410, 1, 0
          %v475 = vsel %vm411, 1, 0
          %v476 = vsel %vm412, 1, 0
          %v477 = vsel %vm413, 1, 0
          %v478 = vsel %vm414, 1, 0
          %v479 = vsel %vm415, 1, 0
          %v480 = vsel %vm416, 1, 0
          %v481 = vsel %vm417, 1, 0
          %v482 = vsel %vm418, 1, 0
          %v483 = vsel %vm419, 1, 0
          %v484 = vsel %vm420, 1, 0
          %v485 = vsel %vm421, 1, 0
          %v486 = vsel %vm422, 1, 0
          %v487 = vsel %vm423, 1, 0
          %v488 = vsel %vm424, 1, 0
          %v489 = vsel %vm425, 1, 0
          %v490 = vsel %vm426, 1, 0
          %v491 = vsel %vm427, 1, 0
          %v492 = vsel %vm428, 1, 0
          %v493 = vsel %vm429, 1, 0
          %v494 = vsel %vm430, 1, 0
          %v495 = vsel %vm431, 1, 0
          %v496 = vsel %vm432, 1, 0
          %v497 = vsel %vm433, 1, 0
          %v498 = vsel %vm434, 1, 0
          %v499 = vsel %vm435, 1, 0
          %v500 = vsel %vm436, 1, 0
          %v501 = vsel %vm437, 1, 0
          %v502 = vsel %vm438, 1, 0
          %v503 = vsel %vm439, 1, 0
          %v504 = vsel %vm440, 1, 0
          %v505 = vsel %vm441, 1, 0
          %v506 = vsel %vm442, 1, 0
          %v507 = vsel %vm443, 1, 0
          %v508 = vsel %vm444, 1, 0
          %v509 = vsel %vm445, 1, 0
          %v510 = vcvt.s32.f32 %v446
          %v511 = vcvt.s32.f32 %v447
          %v512 = vcvt.s32.f32 %v448
          %v513 = vcvt.s32.f32 %v449
          %v514 = vcvt.s32.f32 %v450
          %v515 = vcvt.s32.f32 %v451
          %v516 = vcvt.s32.f32 %v452
          %v517 = vcvt.s32.f32 %v453
          %v518 = vcvt.s32.f32 %v454
          %v519 = vcvt.s32.f32 %v455
          %v520 = vcvt.s32.f32 %v456
          %v521 = vcvt.s32.f32 %v457
          %v522 = vcvt.s32.f32 %v458
          %v523 = vcvt.s32.f32 %v459
          %v524 = vcvt.s32.f32 %v460
          %v525 = vcvt.s32.f32 %v461
          %v526 = vcvt.s32.f32 %v462
          %v527 = vcvt.s32.f32 %v463
          %v528 = vcvt.s32.f32 %v464
          %v529 = vcvt.s32.f32 %v465
          %v530 = vcvt.s32.f32 %v466
          %v531 = vcvt.s32.f32 %v467
          %v532 = vcvt.s32.f32 %v468
          %v533 = vcvt.s32.f32 %v469
          %v534 = vcvt.s32.f32 %v470
          %v535 = vcvt.s32.f32 %v471
          %v536 = vcvt.s32.f32 %v472
          %v537 = vcvt.s32.f32 %v473
          %v538 = vcvt.s32.f32 %v474
          %v539 = vcvt.s32.f32 %v475
          %v540 = vcvt.s32.f32 %v476
          %v541 = vcvt.s32.f32 %v477
          %v542 = vcvt.s32.f32 %v478
          %v543 = vcvt.s32.f32 %v479
          %v544 = vcvt.s32.f32 %v480
          %v545 = vcvt.s32.f32 %v481
          %v546 = vcvt.s32.f32 %v482
          %v547 = vcvt.s32.f32 %v483
          %v548 = vcvt.s32.f32 %v484
          %v549 = vcvt.s32.f32 %v485
          %v550 = vcvt.s32.f32 %v486
          %v551 = vcvt.s32.f32 %v487
          %v552 = vcvt.s32.f32 %v488
          %v553 = vcvt.s32.f32 %v489
          %v554 = vcvt.s32.f32 %v490
          %v555 = vcvt.s32.f32 %v491
          %v556 = vcvt.s32.f32 %v492
          %v557 = vcvt.s32.f32 %v493
          %v558 = vcvt.s32.f32 %v494
          %v559 = vcvt.s32.f32 %v495
          %v560 = vcvt.s32.f32 %v496
          %v561 = vcvt.s32.f32 %v497
          %v562 = vcvt.s32.f32 %v498
          %v563 = vcvt.s32.f32 %v499
          %v564 = vcvt.s32.f32 %v500
          %v565 = vcvt.s32.f32 %v501
          %v566 = vcvt.s32.f32 %v502
          %v567 = vcvt.s32.f32 %v503
          %v568 = vcvt.s32.f32 %v504
          %v569 = vcvt.s32.f32 %v505
          %v570 = vcvt.s32.f32 %v506
          %v571 = vcvt.s32.f32 %v507
          %v572 = vcvt.s32.f32 %v508
          %v573 = vcvt.s32.f32 %v509
          %v574 = vpack.c.bf16 %v512, %v510
          %v575 = vpack.c.bf16 %v513, %v511
          %v576 = vpack.c.bf16 %v516, %v514
          %v577 = vpack.c.bf16 %v517, %v515
          %v578 = vpack.c.bf16 %v520, %v518
          %v579 = vpack.c.bf16 %v521, %v519
          %v580 = vpack.c.bf16 %v524, %v522
          %v581 = vpack.c.bf16 %v525, %v523
          %v582 = vpack.c.bf16 %v528, %v526
          %v583 = vpack.c.bf16 %v529, %v527
          %v584 = vpack.c.bf16 %v532, %v530
          %v585 = vpack.c.bf16 %v533, %v531
          %v586 = vpack.c.bf16 %v536, %v534
          %v587 = vpack.c.bf16 %v537, %v535
          %v588 = vpack.c.bf16 %v540, %v538
          %v589 = vpack.c.bf16 %v541, %v539
          %v590 = vpack.c.bf16 %v544, %v542
          %v591 = vpack.c.bf16 %v545, %v543
          %v592 = vpack.c.bf16 %v548, %v546
          %v593 = vpack.c.bf16 %v549, %v547
          %v594 = vpack.c.bf16 %v552, %v550
          %v595 = vpack.c.bf16 %v553, %v551
          %v596 = vpack.c.bf16 %v556, %v554
          %v597 = vpack.c.bf16 %v557, %v555
          %v598 = vpack.c.bf16 %v560, %v558
          %v599 = vpack.c.bf16 %v561, %v559
          %v600 = vpack.c.bf16 %v564, %v562
          %v601 = vpack.c.bf16 %v565, %v563
          %v602 = vpack.c.bf16 %v568, %v566
          %v603 = vpack.c.bf16 %v569, %v567
          %v604 = vpack.c.bf16 %v572, %v570
          %v605 = vpack.c.bf16 %v573, %v571
          %v606 = vld [vmem:[#allocation2] sm:$0x3f]
          %v607 = vld [vmem:[#allocation2 + $0x8] sm:$0x3f]
          %v609 = vunpack.c.l.b16 %v372
          %v610 = vunpack.c.h.b16 %v372
          %v611 = vpack.c.b16 %v609, %v609
          %v612 = vpack.c.b16 %v610, %v610
          %615 = vmatprep.subr.bf16.mxu0 %v575
          %616 = vmatpush1.bf16.msra.mxu0 %v574
          %617 = vmatprep.subr.bf16.mxu0 %v577
          %618 = vmatpush1.bf16.msra.mxu0 %v576
          %619 = vmatprep.subr.bf16.mxu0 %v579
          %620 = vmatpush1.bf16.msra.mxu0 %v578
          %621 = vmatprep.subr.bf16.mxu0 %v581
          %622 = vmatpush1.bf16.msra.mxu0 %v580
          %623 = vmatprep.subr.bf16.mxu0 %v583
          %624 = vmatpush1.bf16.msra.mxu0 %v582
          %625 = vmatprep.subr.bf16.mxu0 %v585
          %626 = vmatpush1.bf16.msra.mxu0 %v584
          %627 = vmatprep.subr.bf16.mxu0 %v587
          %628 = vmatpush1.bf16.msra.mxu0 %v586
          %629 = vmatprep.subr.bf16.mxu0 %v589
          %630 = vmatpush1.bf16.msra.mxu0 %v588
          %631 = vmatprep.subr.bf16.mxu0 %v591
          %632 = vmatpush1.bf16.msra.mxu0 %v590
          %633 = vmatprep.subr.bf16.mxu0 %v593
          %634 = vmatpush1.bf16.msra.mxu0 %v592
          %635 = vmatprep.subr.bf16.mxu0 %v595
          %636 = vmatpush1.bf16.msra.mxu0 %v594
          %637 = vmatprep.subr.bf16.mxu0 %v597
          %638 = vmatpush1.bf16.msra.mxu0 %v596
          %639 = vmatprep.subr.bf16.mxu0 %v599
          %640 = vmatpush1.bf16.msra.mxu0 %v598
          %641 = vmatprep.subr.bf16.mxu0 %v601
          %642 = vmatpush1.bf16.msra.mxu0 %v600
          %643 = vmatprep.subr.bf16.mxu0 %v603
          %644 = vmatpush1.bf16.msra.mxu0 %v602
          %645 = vmatprep.subr.bf16.mxu0 %v605
          %646 = vmatpush1.bf16.msra.mxu0 %v604
          %647 = vmatprep.mubr.bf16.mxu0 %v612
          %648 = vmatmul.mubr.bf16.gmra.mrb[0].mxu0 %v611
          %v649 = vpop.f32.mrb[0].mxu0
          %v650 = vadd.f32 0.0, %v649
          %v651 = vpop.f32.mrb[0].mxu0
          %v652 = vadd.f32 0.0, %v651
          %v653 = vpop.f32.mrb[0].mxu0
          %v654 = vpop.f32.mrb[0].mxu0
          %655 = vdwg.mxu0
          %v656 = vadd.f32 %v606, %v650
          %v657 = vadd.f32 %v607, %v652
          %658 = vst [vmem:[#allocation2] sm:$0x3f] %v656
          %659 = vst [vmem:[#allocation2 + $0x8] sm:$0x3f] %v657
          %v660 = vld [vmem:[%s237 + $0x2] sm:$0x3]
          %v661 = vlaneseq
          %v662 = vshrl.u32 %v661, 7
          %v663 = vsub.s32 0, %v662
          %v664 = vrot.slane %v660, %v663
          %v665 = vlaneseq
          %v666 = vshrl.u32 %v665, 7
          %v667 = vsub.s32 1, %v666
          %v668 = vrot.slane %v660, %v667
          %vm669 = vcmp.eq.s32.totalorder %v340, %v664
          %vm670 = vcmp.eq.s32.totalorder %v340, %v668
          %vm671 = vcmp.eq.s32.totalorder %v341, %v664
          %vm672 = vcmp.eq.s32.totalorder %v341, %v668
          %vm673 = vcmp.eq.s32.totalorder %v342, %v664
          %vm674 = vcmp.eq.s32.totalorder %v342, %v668
          %vm675 = vcmp.eq.s32.totalorder %v343, %v664
          %vm676 = vcmp.eq.s32.totalorder %v343, %v668
          %vm677 = vcmp.eq.s32.totalorder %v344, %v664
          %vm678 = vcmp.eq.s32.totalorder %v344, %v668
          %vm679 = vcmp.eq.s32.totalorder %v345, %v664
          %vm680 = vcmp.eq.s32.totalorder %v345, %v668
          %vm681 = vcmp.eq.s32.totalorder %v346, %v664
          %vm682 = vcmp.eq.s32.totalorder %v346, %v668
          %vm683 = vcmp.eq.s32.totalorder %v347, %v664
          %vm684 = vcmp.eq.s32.totalorder %v347, %v668
          %vm685 = vcmp.eq.s32.totalorder %v348, %v664
          %vm686 = vcmp.eq.s32.totalorder %v348, %v668
          %vm687 = vcmp.eq.s32.totalorder %v349, %v664
          %vm688 = vcmp.eq.s32.totalorder %v349, %v668
          %vm689 = vcmp.eq.s32.totalorder %v350, %v664
          %vm690 = vcmp.eq.s32.totalorder %v350, %v668
          %vm691 = vcmp.eq.s32.totalorder %v351, %v664
          %vm692 = vcmp.eq.s32.totalorder %v351, %v668
          %vm693 = vcmp.eq.s32.totalorder %v352, %v664
          %vm694 = vcmp.eq.s32.totalorder %v352, %v668
          %vm695 = vcmp.eq.s32.totalorder %v353, %v664
          %vm696 = vcmp.eq.s32.totalorder %v353, %v668
          %vm697 = vcmp.eq.s32.totalorder %v354, %v664
          %vm698 = vcmp.eq.s32.totalorder %v354, %v668
          %vm699 = vcmp.eq.s32.totalorder %v355, %v664
          %vm700 = vcmp.eq.s32.totalorder %v355, %v668
          %vm701 = vcmp.eq.s32.totalorder %v356, %v664
          %vm702 = vcmp.eq.s32.totalorder %v356, %v668
          %vm703 = vcmp.eq.s32.totalorder %v357, %v664
          %vm704 = vcmp.eq.s32.totalorder %v357, %v668
          %vm705 = vcmp.eq.s32.totalorder %v358, %v664
          %vm706 = vcmp.eq.s32.totalorder %v358, %v668
          %vm707 = vcmp.eq.s32.totalorder %v359, %v664
          %vm708 = vcmp.eq.s32.totalorder %v359, %v668
          %vm709 = vcmp.eq.s32.totalorder %v360, %v664
          %vm710 = vcmp.eq.s32.totalorder %v360, %v668
          %vm711 = vcmp.eq.s32.totalorder %v361, %v664
          %vm712 = vcmp.eq.s32.totalorder %v361, %v668
          %vm713 = vcmp.eq.s32.totalorder %v362, %v664
          %vm714 = vcmp.eq.s32.totalorder %v362, %v668
          %vm715 = vcmp.eq.s32.totalorder %v363, %v664
          %vm716 = vcmp.eq.s32.totalorder %v363, %v668
          %vm717 = vcmp.eq.s32.totalorder %v364, %v664
          %vm718 = vcmp.eq.s32.totalorder %v364, %v668
          %vm719 = vcmp.eq.s32.totalorder %v365, %v664
          %vm720 = vcmp.eq.s32.totalorder %v365, %v668
          %vm721 = vcmp.eq.s32.totalorder %v366, %v664
          %vm722 = vcmp.eq.s32.totalorder %v366, %v668
          %vm723 = vcmp.eq.s32.totalorder %v367, %v664
          %vm724 = vcmp.eq.s32.totalorder %v367, %v668
          %vm725 = vcmp.eq.s32.totalorder %v368, %v664
          %vm726 = vcmp.eq.s32.totalorder %v368, %v668
          %vm727 = vcmp.eq.s32.totalorder %v369, %v664
          %vm728 = vcmp.eq.s32.totalorder %v369, %v668
          %vm729 = vcmp.eq.s32.totalorder %v370, %v664
          %vm730 = vcmp.eq.s32.totalorder %v370, %v668
          %vm731 = vcmp.eq.s32.totalorder %v371, %v664
          %vm732 = vcmp.eq.s32.totalorder %v371, %v668
          %v733 = vsel %vm669, 1, 0
          %v734 = vsel %vm670, 1, 0
          %v735 = vsel %vm671, 1, 0
          %v736 = vsel %vm672, 1, 0
          %v737 = vsel %vm673, 1, 0
          %v738 = vsel %vm674, 1, 0
          %v739 = vsel %vm675, 1, 0
          %v740 = vsel %vm676, 1, 0
          %v741 = vsel %vm677, 1, 0
          %v742 = vsel %vm678, 1, 0
          %v743 = vsel %vm679, 1, 0
          %v744 = vsel %vm680, 1, 0
          %v745 = vsel %vm681, 1, 0
          %v746 = vsel %vm682, 1, 0
          %v747 = vsel %vm683, 1, 0
          %v748 = vsel %vm684, 1, 0
          %v749 = vsel %vm685, 1, 0
          %v750 = vsel %vm686, 1, 0
          %v751 = vsel %vm687, 1, 0
          %v752 = vsel %vm688, 1, 0
          %v753 = vsel %vm689, 1, 0
          %v754 = vsel %vm690, 1, 0
          %v755 = vsel %vm691, 1, 0
          %v756 = vsel %vm692, 1, 0
          %v757 = vsel %vm693, 1, 0
          %v758 = vsel %vm694, 1, 0
          %v759 = vsel %vm695, 1, 0
          %v760 = vsel %vm696, 1, 0
          %v761 = vsel %vm697, 1, 0
          %v762 = vsel %vm698, 1, 0
          %v763 = vsel %vm699, 1, 0
          %v764 = vsel %vm700, 1, 0
          %v765 = vsel %vm701, 1, 0
          %v766 = vsel %vm702, 1, 0
          %v767 = vsel %vm703, 1, 0
          %v768 = vsel %vm704, 1, 0
          %v769 = vsel %vm705, 1, 0
          %v770 = vsel %vm706, 1, 0
          %v771 = vsel %vm707, 1, 0
          %v772 = vsel %vm708, 1, 0
          %v773 = vsel %vm709, 1, 0
          %v774 = vsel %vm710, 1, 0
          %v775 = vsel %vm711, 1, 0
          %v776 = vsel %vm712, 1, 0
          %v777 = vsel %vm713, 1, 0
          %v778 = vsel %vm714, 1, 0
          %v779 = vsel %vm715, 1, 0
          %v780 = vsel %vm716, 1, 0
          %v781 = vsel %vm717, 1, 0
          %v782 = vsel %vm718, 1, 0
          %v783 = vsel %vm719, 1, 0
          %v784 = vsel %vm720, 1, 0
          %v785 = vsel %vm721, 1, 0
          %v786 = vsel %vm722, 1, 0
          %v787 = vsel %vm723, 1, 0
          %v788 = vsel %vm724, 1, 0
          %v789 = vsel %vm725, 1, 0
          %v790 = vsel %vm726, 1, 0
          %v791 = vsel %vm727, 1, 0
          %v792 = vsel %vm728, 1, 0
          %v793 = vsel %vm729, 1, 0
          %v794 = vsel %vm730, 1, 0
          %v795 = vsel %vm731, 1, 0
          %v796 = vsel %vm732, 1, 0
          %v797 = vcvt.s32.f32 %v733
          %v798 = vcvt.s32.f32 %v734
          %v799 = vcvt.s32.f32 %v735
          %v800 = vcvt.s32.f32 %v736
          %v801 = vcvt.s32.f32 %v737
          %v802 = vcvt.s32.f32 %v738
          %v803 = vcvt.s32.f32 %v739
          %v804 = vcvt.s32.f32 %v740
          %v805 = vcvt.s32.f32 %v741
          %v806 = vcvt.s32.f32 %v742
          %v807 = vcvt.s32.f32 %v743
          %v808 = vcvt.s32.f32 %v744
          %v809 = vcvt.s32.f32 %v745
          %v810 = vcvt.s32.f32 %v746
          %v811 = vcvt.s32.f32 %v747
          %v812 = vcvt.s32.f32 %v748
          %v813 = vcvt.s32.f32 %v749
          %v814 = vcvt.s32.f32 %v750
          %v815 = vcvt.s32.f32 %v751
          %v816 = vcvt.s32.f32 %v752
          %v817 = vcvt.s32.f32 %v753
          %v818 = vcvt.s32.f32 %v754
          %v819 = vcvt.s32.f32 %v755
          %v820 = vcvt.s32.f32 %v756
          %v821 = vcvt.s32.f32 %v757
          %v822 = vcvt.s32.f32 %v758
          %v823 = vcvt.s32.f32 %v759
          %v824 = vcvt.s32.f32 %v760
          %v825 = vcvt.s32.f32 %v761
          %v826 = vcvt.s32.f32 %v762
          %v827 = vcvt.s32.f32 %v763
          %v828 = vcvt.s32.f32 %v764
          %v829 = vcvt.s32.f32 %v765
          %v830 = vcvt.s32.f32 %v766
          %v831 = vcvt.s32.f32 %v767
          %v832 = vcvt.s32.f32 %v768
          %v833 = vcvt.s32.f32 %v769
          %v834 = vcvt.s32.f32 %v770
          %v835 = vcvt.s32.f32 %v771
          %v836 = vcvt.s32.f32 %v772
          %v837 = vcvt.s32.f32 %v773
          %v838 = vcvt.s32.f32 %v774
          %v839 = vcvt.s32.f32 %v775
          %v840 = vcvt.s32.f32 %v776
          %v841 = vcvt.s32.f32 %v777
          %v842 = vcvt.s32.f32 %v778
          %v843 = vcvt.s32.f32 %v779
          %v844 = vcvt.s32.f32 %v780
          %v845 = vcvt.s32.f32 %v781
          %v846 = vcvt.s32.f32 %v782
          %v847 = vcvt.s32.f32 %v783
          %v848 = vcvt.s32.f32 %v784
          %v849 = vcvt.s32.f32 %v785
          %v850 = vcvt.s32.f32 %v786
          %v851 = vcvt.s32.f32 %v787
          %v852 = vcvt.s32.f32 %v788
          %v853 = vcvt.s32.f32 %v789
          %v854 = vcvt.s32.f32 %v790
          %v855 = vcvt.s32.f32 %v791
          %v856 = vcvt.s32.f32 %v792
          %v857 = vcvt.s32.f32 %v793
          %v858 = vcvt.s32.f32 %v794
          %v859 = vcvt.s32.f32 %v795
          %v860 = vcvt.s32.f32 %v796
          %v861 = vpack.c.bf16 %v799, %v797
          %v862 = vpack.c.bf16 %v800, %v798
          %v863 = vpack.c.bf16 %v803, %v801
          %v864 = vpack.c.bf16 %v804, %v802
          %v865 = vpack.c.bf16 %v807, %v805
          %v866 = vpack.c.bf16 %v808, %v806
          %v867 = vpack.c.bf16 %v811, %v809
          %v868 = vpack.c.bf16 %v812, %v810
          %v869 = vpack.c.bf16 %v815, %v813
          %v870 = vpack.c.bf16 %v816, %v814
          %v871 = vpack.c.bf16 %v819, %v817
          %v872 = vpack.c.bf16 %v820, %v818
          %v873 = vpack.c.bf16 %v823, %v821
          %v874 = vpack.c.bf16 %v824, %v822
          %v875 = vpack.c.bf16 %v827, %v825
          %v876 = vpack.c.bf16 %v828, %v826
          %v877 = vpack.c.bf16 %v831, %v829
          %v878 = vpack.c.bf16 %v832, %v830
          %v879 = vpack.c.bf16 %v835, %v833
          %v880 = vpack.c.bf16 %v836, %v834
          %v881 = vpack.c.bf16 %v839, %v837
          %v882 = vpack.c.bf16 %v840, %v838
          %v883 = vpack.c.bf16 %v843, %v841
          %v884 = vpack.c.bf16 %v844, %v842
          %v885 = vpack.c.bf16 %v847, %v845
          %v886 = vpack.c.bf16 %v848, %v846
          %v887 = vpack.c.bf16 %v851, %v849
          %v888 = vpack.c.bf16 %v852, %v850
          %v889 = vpack.c.bf16 %v855, %v853
          %v890 = vpack.c.bf16 %v856, %v854
          %v891 = vpack.c.bf16 %v859, %v857
          %v892 = vpack.c.bf16 %v860, %v858
          %v893 = vld [vmem:[#allocation2 + $0x10] sm:$0x3f]
          %v894 = vld [vmem:[#allocation2 + $0x18] sm:$0x3f]
          %895 = vmatprep.subr.bf16.mxu0 %v862
          %896 = vmatpush1.bf16.msra.mxu0 %v861
          %897 = vmatprep.subr.bf16.mxu0 %v864
          %898 = vmatpush1.bf16.msra.mxu0 %v863
          %899 = vmatprep.subr.bf16.mxu0 %v866
          %900 = vmatpush1.bf16.msra.mxu0 %v865
          %901 = vmatprep.subr.bf16.mxu0 %v868
          %902 = vmatpush1.bf16.msra.mxu0 %v867
          %903 = vmatprep.subr.bf16.mxu0 %v870
          %904 = vmatpush1.bf16.msra.mxu0 %v869
          %905 = vmatprep.subr.bf16.mxu0 %v872
          %906 = vmatpush1.bf16.msra.mxu0 %v871
          %907 = vmatprep.subr.bf16.mxu0 %v874
          %908 = vmatpush1.bf16.msra.mxu0 %v873
          %909 = vmatprep.subr.bf16.mxu0 %v876
          %910 = vmatpush1.bf16.msra.mxu0 %v875
          %911 = vmatprep.subr.bf16.mxu0 %v878
          %912 = vmatpush1.bf16.msra.mxu0 %v877
          %913 = vmatprep.subr.bf16.mxu0 %v880
          %914 = vmatpush1.bf16.msra.mxu0 %v879
          %915 = vmatprep.subr.bf16.mxu0 %v882
          %916 = vmatpush1.bf16.msra.mxu0 %v881
          %917 = vmatprep.subr.bf16.mxu0 %v884
          %918 = vmatpush1.bf16.msra.mxu0 %v883
          %919 = vmatprep.subr.bf16.mxu0 %v886
          %920 = vmatpush1.bf16.msra.mxu0 %v885
          %921 = vmatprep.subr.bf16.mxu0 %v888
          %922 = vmatpush1.bf16.msra.mxu0 %v887
          %923 = vmatprep.subr.bf16.mxu0 %v890
          %924 = vmatpush1.bf16.msra.mxu0 %v889
          %925 = vmatprep.subr.bf16.mxu0 %v892
          %926 = vmatpush1.bf16.msra.mxu0 %v891
          %927 = vmatprep.mubr.bf16.mxu0 %v612
          %928 = vmatmul.mubr.bf16.gmra.mrb[0].mxu0 %v611
          %v929 = vpop.f32.mrb[0].mxu0
          %v930 = vadd.f32 0.0, %v929
          %v931 = vpop.f32.mrb[0].mxu0
          %v932 = vadd.f32 0.0, %v931
          %v933 = vpop.f32.mrb[0].mxu0
          %v934 = vpop.f32.mrb[0].mxu0
          %935 = vdwg.mxu0
          %v936 = vadd.f32 %v893, %v930
          %v937 = vadd.f32 %v894, %v932
          %938 = vst [vmem:[#allocation2 + $0x10] sm:$0x3f] %v936
          %939 = vst [vmem:[#allocation2 + $0x18] sm:$0x3f] %v937
          %v940 = vld [vmem:[%s237 + $0x4] sm:$0x3]
          %v941 = vlaneseq
          %v942 = vshrl.u32 %v941, 7
          %v943 = vsub.s32 0, %v942
          %v944 = vrot.slane %v940, %v943
          %v945 = vlaneseq
          %v946 = vshrl.u32 %v945, 7
          %v947 = vsub.s32 1, %v946
          %v948 = vrot.slane %v940, %v947
          %vm949 = vcmp.eq.s32.totalorder %v340, %v944
          %vm950 = vcmp.eq.s32.totalorder %v340, %v948
          %vm951 = vcmp.eq.s32.totalorder %v341, %v944
          %vm952 = vcmp.eq.s32.totalorder %v341, %v948
          %vm953 = vcmp.eq.s32.totalorder %v342, %v944
          %vm954 = vcmp.eq.s32.totalorder %v342, %v948
          %vm955 = vcmp.eq.s32.totalorder %v343, %v944
          %vm956 = vcmp.eq.s32.totalorder %v343, %v948
          %vm957 = vcmp.eq.s32.totalorder %v344, %v944
          %vm958 = vcmp.eq.s32.totalorder %v344, %v948
          %vm959 = vcmp.eq.s32.totalorder %v345, %v944
          %vm960 = vcmp.eq.s32.totalorder %v345, %v948
          %vm961 = vcmp.eq.s32.totalorder %v346, %v944
          %vm962 = vcmp.eq.s32.totalorder %v346, %v948
          %vm963 = vcmp.eq.s32.totalorder %v347, %v944
          %vm964 = vcmp.eq.s32.totalorder %v347, %v948
          %vm965 = vcmp.eq.s32.totalorder %v348, %v944
          %vm966 = vcmp.eq.s32.totalorder %v348, %v948
          %vm967 = vcmp.eq.s32.totalorder %v349, %v944
          %vm968 = vcmp.eq.s32.totalorder %v349, %v948
          %vm969 = vcmp.eq.s32.totalorder %v350, %v944
          %vm970 = vcmp.eq.s32.totalorder %v350, %v948
          %vm971 = vcmp.eq.s32.totalorder %v351, %v944
          %vm972 = vcmp.eq.s32.totalorder %v351, %v948
          %vm973 = vcmp.eq.s32.totalorder %v352, %v944
          %vm974 = vcmp.eq.s32.totalorder %v352, %v948
          %vm975 = vcmp.eq.s32.totalorder %v353, %v944
          %vm976 = vcmp.eq.s32.totalorder %v353, %v948
          %vm977 = vcmp.eq.s32.totalorder %v354, %v944
          %vm978 = vcmp.eq.s32.totalorder %v354, %v948
          %vm979 = vcmp.eq.s32.totalorder %v355, %v944
          %vm980 = vcmp.eq.s32.totalorder %v355, %v948
          %vm981 = vcmp.eq.s32.totalorder %v356, %v944
          %vm982 = vcmp.eq.s32.totalorder %v356, %v948
          %vm983 = vcmp.eq.s32.totalorder %v357, %v944
          %vm984 = vcmp.eq.s32.totalorder %v357, %v948
          %vm985 = vcmp.eq.s32.totalorder %v358, %v944
          %vm986 = vcmp.eq.s32.totalorder %v358, %v948
          %vm987 = vcmp.eq.s32.totalorder %v359, %v944
          %vm988 = vcmp.eq.s32.totalorder %v359, %v948
          %vm989 = vcmp.eq.s32.totalorder %v360, %v944
          %vm990 = vcmp.eq.s32.totalorder %v360, %v948
          %vm991 = vcmp.eq.s32.totalorder %v361, %v944
          %vm992 = vcmp.eq.s32.totalorder %v361, %v948
          %vm993 = vcmp.eq.s32.totalorder %v362, %v944
          %vm994 = vcmp.eq.s32.totalorder %v362, %v948
          %vm995 = vcmp.eq.s32.totalorder %v363, %v944
          %vm996 = vcmp.eq.s32.totalorder %v363, %v948
          %vm997 = vcmp.eq.s32.totalorder %v364, %v944
          %vm998 = vcmp.eq.s32.totalorder %v364, %v948
          %vm999 = vcmp.eq.s32.totalorder %v365, %v944
          %vm1000 = vcmp.eq.s32.totalorder %v365, %v948
          %vm1001 = vcmp.eq.s32.totalorder %v366, %v944
          %vm1002 = vcmp.eq.s32.totalorder %v366, %v948
          %vm1003 = vcmp.eq.s32.totalorder %v367, %v944
          %vm1004 = vcmp.eq.s32.totalorder %v367, %v948
          %vm1005 = vcmp.eq.s32.totalorder %v368, %v944
          %vm1006 = vcmp.eq.s32.totalorder %v368, %v948
          %vm1007 = vcmp.eq.s32.totalorder %v369, %v944
          %vm1008 = vcmp.eq.s32.totalorder %v369, %v948
          %vm1009 = vcmp.eq.s32.totalorder %v370, %v944
          %vm1010 = vcmp.eq.s32.totalorder %v370, %v948
          %vm1011 = vcmp.eq.s32.totalorder %v371, %v944
          %vm1012 = vcmp.eq.s32.totalorder %v371, %v948
          %v1013 = vsel %vm949, 1, 0
          %v1014 = vsel %vm950, 1, 0
          %v1015 = vsel %vm951, 1, 0
          %v1016 = vsel %vm952, 1, 0
          %v1017 = vsel %vm953, 1, 0
          %v1018 = vsel %vm954, 1, 0
          %v1019 = vsel %vm955, 1, 0
          %v1020 = vsel %vm956, 1, 0
          %v1021 = vsel %vm957, 1, 0
          %v1022 = vsel %vm958, 1, 0
          %v1023 = vsel %vm959, 1, 0
          %v1024 = vsel %vm960, 1, 0
          %v1025 = vsel %vm961, 1, 0
          %v1026 = vsel %vm962, 1, 0
          %v1027 = vsel %vm963, 1, 0
          %v1028 = vsel %vm964, 1, 0
          %v1029 = vsel %vm965, 1, 0
          %v1030 = vsel %vm966, 1, 0
          %v1031 = vsel %vm967, 1, 0
          %v1032 = vsel %vm968, 1, 0
          %v1033 = vsel %vm969, 1, 0
          %v1034 = vsel %vm970, 1, 0
          %v1035 = vsel %vm971, 1, 0
          %v1036 = vsel %vm972, 1, 0
          %v1037 = vsel %vm973, 1, 0
          %v1038 = vsel %vm974, 1, 0
          %v1039 = vsel %vm975, 1, 0
          %v1040 = vsel %vm976, 1, 0
          %v1041 = vsel %vm977, 1, 0
          %v1042 = vsel %vm978, 1, 0
          %v1043 = vsel %vm979, 1, 0
          %v1044 = vsel %vm980, 1, 0
          %v1045 = vsel %vm981, 1, 0
          %v1046 = vsel %vm982, 1, 0
          %v1047 = vsel %vm983, 1, 0
          %v1048 = vsel %vm984, 1, 0
          %v1049 = vsel %vm985, 1, 0
          %v1050 = vsel %vm986, 1, 0
          %v1051 = vsel %vm987, 1, 0
          %v1052 = vsel %vm988, 1, 0
          %v1053 = vsel %vm989, 1, 0
          %v1054 = vsel %vm990, 1, 0
          %v1055 = vsel %vm991, 1, 0
          %v1056 = vsel %vm992, 1, 0
          %v1057 = vsel %vm993, 1, 0
          %v1058 = vsel %vm994, 1, 0
          %v1059 = vsel %vm995, 1, 0
          %v1060 = vsel %vm996, 1, 0
          %v1061 = vsel %vm997, 1, 0
          %v1062 = vsel %vm998, 1, 0
          %v1063 = vsel %vm999, 1, 0
          %v1064 = vsel %vm1000, 1, 0
          %v1065 = vsel %vm1001, 1, 0
          %v1066 = vsel %vm1002, 1, 0
          %v1067 = vsel %vm1003, 1, 0
          %v1068 = vsel %vm1004, 1, 0
          %v1069 = vsel %vm1005, 1, 0
          %v1070 = vsel %vm1006, 1, 0
          %v1071 = vsel %vm1007, 1, 0
          %v1072 = vsel %vm1008, 1, 0
          %v1073 = vsel %vm1009, 1, 0
          %v1074 = vsel %vm1010, 1, 0
          %v1075 = vsel %vm1011, 1, 0
          %v1076 = vsel %vm1012, 1, 0
          %v1077 = vcvt.s32.f32 %v1013
          %v1078 = vcvt.s32.f32 %v1014
          %v1079 = vcvt.s32.f32 %v1015
          %v1080 = vcvt.s32.f32 %v1016
          %v1081 = vcvt.s32.f32 %v1017
          %v1082 = vcvt.s32.f32 %v1018
          %v1083 = vcvt.s32.f32 %v1019
          %v1084 = vcvt.s32.f32 %v1020
          %v1085 = vcvt.s32.f32 %v1021
          %v1086 = vcvt.s32.f32 %v1022
          %v1087 = vcvt.s32.f32 %v1023
          %v1088 = vcvt.s32.f32 %v1024
          %v1089 = vcvt.s32.f32 %v1025
          %v1090 = vcvt.s32.f32 %v1026
          %v1091 = vcvt.s32.f32 %v1027
          %v1092 = vcvt.s32.f32 %v1028
          %v1093 = vcvt.s32.f32 %v1029
          %v1094 = vcvt.s32.f32 %v1030
          %v1095 = vcvt.s32.f32 %v1031
          %v1096 = vcvt.s32.f32 %v1032
          %v1097 = vcvt.s32.f32 %v1033
          %v1098 = vcvt.s32.f32 %v1034
          %v1099 = vcvt.s32.f32 %v1035
          %v1100 = vcvt.s32.f32 %v1036
          %v1101 = vcvt.s32.f32 %v1037
          %v1102 = vcvt.s32.f32 %v1038
          %v1103 = vcvt.s32.f32 %v1039
          %v1104 = vcvt.s32.f32 %v1040
          %v1105 = vcvt.s32.f32 %v1041
          %v1106 = vcvt.s32.f32 %v1042
          %v1107 = vcvt.s32.f32 %v1043
          %v1108 = vcvt.s32.f32 %v1044
          %v1109 = vcvt.s32.f32 %v1045
          %v1110 = vcvt.s32.f32 %v1046
          %v1111 = vcvt.s32.f32 %v1047
          %v1112 = vcvt.s32.f32 %v1048
          %v1113 = vcvt.s32.f32 %v1049
          %v1114 = vcvt.s32.f32 %v1050
          %v1115 = vcvt.s32.f32 %v1051
          %v1116 = vcvt.s32.f32 %v1052
          %v1117 = vcvt.s32.f32 %v1053
          %v1118 = vcvt.s32.f32 %v1054
          %v1119 = vcvt.s32.f32 %v1055
          %v1120 = vcvt.s32.f32 %v1056
          %v1121 = vcvt.s32.f32 %v1057
          %v1122 = vcvt.s32.f32 %v1058
          %v1123 = vcvt.s32.f32 %v1059
          %v1124 = vcvt.s32.f32 %v1060
          %v1125 = vcvt.s32.f32 %v1061
          %v1126 = vcvt.s32.f32 %v1062
          %v1127 = vcvt.s32.f32 %v1063
          %v1128 = vcvt.s32.f32 %v1064
          %v1129 = vcvt.s32.f32 %v1065
          %v1130 = vcvt.s32.f32 %v1066
          %v1131 = vcvt.s32.f32 %v1067
          %v1132 = vcvt.s32.f32 %v1068
          %v1133 = vcvt.s32.f32 %v1069
          %v1134 = vcvt.s32.f32 %v1070
          %v1135 = vcvt.s32.f32 %v1071
          %v1136 = vcvt.s32.f32 %v1072
          %v1137 = vcvt.s32.f32 %v1073
          %v1138 = vcvt.s32.f32 %v1074
          %v1139 = vcvt.s32.f32 %v1075
          %v1140 = vcvt.s32.f32 %v1076
          %v1141 = vpack.c.bf16 %v1079, %v1077
          %v1142 = vpack.c.bf16 %v1080, %v1078
          %v1143 = vpack.c.bf16 %v1083, %v1081
          %v1144 = vpack.c.bf16 %v1084, %v1082
          %v1145 = vpack.c.bf16 %v1087, %v1085
          %v1146 = vpack.c.bf16 %v1088, %v1086
          %v1147 = vpack.c.bf16 %v1091, %v1089
          %v1148 = vpack.c.bf16 %v1092, %v1090
          %v1149 = vpack.c.bf16 %v1095, %v1093
          %v1150 = vpack.c.bf16 %v1096, %v1094
          %v1151 = vpack.c.bf16 %v1099, %v1097
          %v1152 = vpack.c.bf16 %v1100, %v1098
          %v1153 = vpack.c.bf16 %v1103, %v1101
          %v1154 = vpack.c.bf16 %v1104, %v1102
          %v1155 = vpack.c.bf16 %v1107, %v1105
          %v1156 = vpack.c.bf16 %v1108, %v1106
          %v1157 = vpack.c.bf16 %v1111, %v1109
          %v1158 = vpack.c.bf16 %v1112, %v1110
          %v1159 = vpack.c.bf16 %v1115, %v1113
          %v1160 = vpack.c.bf16 %v1116, %v1114
          %v1161 = vpack.c.bf16 %v1119, %v1117
          %v1162 = vpack.c.bf16 %v1120, %v1118
          %v1163 = vpack.c.bf16 %v1123, %v1121
          %v1164 = vpack.c.bf16 %v1124, %v1122
          %v1165 = vpack.c.bf16 %v1127, %v1125
          %v1166 = vpack.c.bf16 %v1128, %v1126
          %v1167 = vpack.c.bf16 %v1131, %v1129
          %v1168 = vpack.c.bf16 %v1132, %v1130
          %v1169 = vpack.c.bf16 %v1135, %v1133
          %v1170 = vpack.c.bf16 %v1136, %v1134
          %v1171 = vpack.c.bf16 %v1139, %v1137
          %v1172 = vpack.c.bf16 %v1140, %v1138
          %v1173 = vld [vmem:[#allocation2 + $0x20] sm:$0x3f]
          %v1174 = vld [vmem:[#allocation2 + $0x28] sm:$0x3f]
          %1175 = vmatprep.subr.bf16.mxu0 %v1142
          %1176 = vmatpush1.bf16.msra.mxu0 %v1141
          %1177 = vmatprep.subr.bf16.mxu0 %v1144
          %1178 = vmatpush1.bf16.msra.mxu0 %v1143
          %1179 = vmatprep.subr.bf16.mxu0 %v1146
          %1180 = vmatpush1.bf16.msra.mxu0 %v1145
          %1181 = vmatprep.subr.bf16.mxu0 %v1148
          %1182 = vmatpush1.bf16.msra.mxu0 %v1147
          %1183 = vmatprep.subr.bf16.mxu0 %v1150
          %1184 = vmatpush1.bf16.msra.mxu0 %v1149
          %1185 = vmatprep.subr.bf16.mxu0 %v1152
          %1186 = vmatpush1.bf16.msra.mxu0 %v1151
          %1187 = vmatprep.subr.bf16.mxu0 %v1154
          %1188 = vmatpush1.bf16.msra.mxu0 %v1153
          %1189 = vmatprep.subr.bf16.mxu0 %v1156
          %1190 = vmatpush1.bf16.msra.mxu0 %v1155
          %1191 = vmatprep.subr.bf16.mxu0 %v1158
          %1192 = vmatpush1.bf16.msra.mxu0 %v1157
          %1193 = vmatprep.subr.bf16.mxu0 %v1160
          %1194 = vmatpush1.bf16.msra.mxu0 %v1159
          %1195 = vmatprep.subr.bf16.mxu0 %v1162
          %1196 = vmatpush1.bf16.msra.mxu0 %v1161
          %1197 = vmatprep.subr.bf16.mxu0 %v1164
          %1198 = vmatpush1.bf16.msra.mxu0 %v1163
          %1199 = vmatprep.subr.bf16.mxu0 %v1166
          %1200 = vmatpush1.bf16.msra.mxu0 %v1165
          %1201 = vmatprep.subr.bf16.mxu0 %v1168
          %1202 = vmatpush1.bf16.msra.mxu0 %v1167
          %1203 = vmatprep.subr.bf16.mxu0 %v1170
          %1204 = vmatpush1.bf16.msra.mxu0 %v1169
          %1205 = vmatprep.subr.bf16.mxu0 %v1172
          %1206 = vmatpush1.bf16.msra.mxu0 %v1171
          %1207 = vmatprep.mubr.bf16.mxu0 %v612
          %1208 = vmatmul.mubr.bf16.gmra.mrb[0].mxu0 %v611
          %v1209 = vpop.f32.mrb[0].mxu0
          %v1210 = vadd.f32 0.0, %v1209
          %v1211 = vpop.f32.mrb[0].mxu0
          %v1212 = vadd.f32 0.0, %v1211
          %v1213 = vpop.f32.mrb[0].mxu0
          %v1214 = vpop.f32.mrb[0].mxu0
          %1215 = vdwg.mxu0
          %v1216 = vadd.f32 %v1173, %v1210
          %v1217 = vadd.f32 %v1174, %v1212
          %1218 = vst [vmem:[#allocation2 + $0x20] sm:$0x3f] %v1216
          %1219 = vst [vmem:[#allocation2 + $0x28] sm:$0x3f] %v1217
          %v1220 = vld [vmem:[%s237 + $0x6] sm:$0x3]
          %v1221 = vlaneseq
          %v1222 = vshrl.u32 %v1221, 7
          %v1223 = vsub.s32 0, %v1222
          %v1224 = vrot.slane %v1220, %v1223
          %v1225 = vlaneseq
          %v1226 = vshrl.u32 %v1225, 7
          %v1227 = vsub.s32 1, %v1226
          %v1228 = vrot.slane %v1220, %v1227
          %vm1229 = vcmp.eq.s32.totalorder %v340, %v1224
          %vm1230 = vcmp.eq.s32.totalorder %v340, %v1228
          %vm1231 = vcmp.eq.s32.totalorder %v341, %v1224
          %vm1232 = vcmp.eq.s32.totalorder %v341, %v1228
          %vm1233 = vcmp.eq.s32.totalorder %v342, %v1224
          %vm1234 = vcmp.eq.s32.totalorder %v342, %v1228
          %vm1235 = vcmp.eq.s32.totalorder %v343, %v1224
          %vm1236 = vcmp.eq.s32.totalorder %v343, %v1228
          %vm1237 = vcmp.eq.s32.totalorder %v344, %v1224
          %vm1238 = vcmp.eq.s32.totalorder %v344, %v1228
          %vm1239 = vcmp.eq.s32.totalorder %v345, %v1224
          %vm1240 = vcmp.eq.s32.totalorder %v345, %v1228
          %vm1241 = vcmp.eq.s32.totalorder %v346, %v1224
          %vm1242 = vcmp.eq.s32.totalorder %v346, %v1228
          %vm1243 = vcmp.eq.s32.totalorder %v347, %v1224
          %vm1244 = vcmp.eq.s32.totalorder %v347, %v1228
          %vm1245 = vcmp.eq.s32.totalorder %v348, %v1224
          %vm1246 = vcmp.eq.s32.totalorder %v348, %v1228
          %vm1247 = vcmp.eq.s32.totalorder %v349, %v1224
          %vm1248 = vcmp.eq.s32.totalorder %v349, %v1228
          %vm1249 = vcmp.eq.s32.totalorder %v350, %v1224
          %vm1250 = vcmp.eq.s32.totalorder %v350, %v1228
          %vm1251 = vcmp.eq.s32.totalorder %v351, %v1224
          %vm1252 = vcmp.eq.s32.totalorder %v351, %v1228
          %vm1253 = vcmp.eq.s32.totalorder %v352, %v1224
          %vm1254 = vcmp.eq.s32.totalorder %v352, %v1228
          %vm1255 = vcmp.eq.s32.totalorder %v353, %v1224
          %vm1256 = vcmp.eq.s32.totalorder %v353, %v1228
          %vm1257 = vcmp.eq.s32.totalorder %v354, %v1224
          %vm1258 = vcmp.eq.s32.totalorder %v354, %v1228
          %vm1259 = vcmp.eq.s32.totalorder %v355, %v1224
          %vm1260 = vcmp.eq.s32.totalorder %v355, %v1228
          %vm1261 = vcmp.eq.s32.totalorder %v356, %v1224
          %vm1262 = vcmp.eq.s32.totalorder %v356, %v1228
          %vm1263 = vcmp.eq.s32.totalorder %v357, %v1224
          %vm1264 = vcmp.eq.s32.totalorder %v357, %v1228
          %vm1265 = vcmp.eq.s32.totalorder %v358, %v1224
          %vm1266 = vcmp.eq.s32.totalorder %v358, %v1228
          %vm1267 = vcmp.eq.s32.totalorder %v359, %v1224
          %vm1268 = vcmp.eq.s32.totalorder %v359, %v1228
          %vm1269 = vcmp.eq.s32.totalorder %v360, %v1224
          %vm1270 = vcmp.eq.s32.totalorder %v360, %v1228
          %vm1271 = vcmp.eq.s32.totalorder %v361, %v1224
          %vm1272 = vcmp.eq.s32.totalorder %v361, %v1228
          %vm1273 = vcmp.eq.s32.totalorder %v362, %v1224
          %vm1274 = vcmp.eq.s32.totalorder %v362, %v1228
          %vm1275 = vcmp.eq.s32.totalorder %v363, %v1224
          %vm1276 = vcmp.eq.s32.totalorder %v363, %v1228
          %vm1277 = vcmp.eq.s32.totalorder %v364, %v1224
          %vm1278 = vcmp.eq.s32.totalorder %v364, %v1228
          %vm1279 = vcmp.eq.s32.totalorder %v365, %v1224
          %vm1280 = vcmp.eq.s32.totalorder %v365, %v1228
          %vm1281 = vcmp.eq.s32.totalorder %v366, %v1224
          %vm1282 = vcmp.eq.s32.totalorder %v366, %v1228
          %vm1283 = vcmp.eq.s32.totalorder %v367, %v1224
          %vm1284 = vcmp.eq.s32.totalorder %v367, %v1228
          %vm1285 = vcmp.eq.s32.totalorder %v368, %v1224
          %vm1286 = vcmp.eq.s32.totalorder %v368, %v1228
          %vm1287 = vcmp.eq.s32.totalorder %v369, %v1224
          %vm1288 = vcmp.eq.s32.totalorder %v369, %v1228
          %vm1289 = vcmp.eq.s32.totalorder %v370, %v1224
          %vm1290 = vcmp.eq.s32.totalorder %v370, %v1228
          %vm1291 = vcmp.eq.s32.totalorder %v371, %v1224
          %vm1292 = vcmp.eq.s32.totalorder %v371, %v1228
          %v1293 = vsel %vm1229, 1, 0
          %v1294 = vsel %vm1230, 1, 0
          %v1295 = vsel %vm1231, 1, 0
          %v1296 = vsel %vm1232, 1, 0
          %v1297 = vsel %vm1233, 1, 0
          %v1298 = vsel %vm1234, 1, 0
          %v1299 = vsel %vm1235, 1, 0
          %v1300 = vsel %vm1236, 1, 0
          %v1301 = vsel %vm1237, 1, 0
          %v1302 = vsel %vm1238, 1, 0
          %v1303 = vsel %vm1239, 1, 0
          %v1304 = vsel %vm1240, 1, 0
          %v1305 = vsel %vm1241, 1, 0
          %v1306 = vsel %vm1242, 1, 0
          %v1307 = vsel %vm1243, 1, 0
          %v1308 = vsel %vm1244, 1, 0
          %v1309 = vsel %vm1245, 1, 0
          %v1310 = vsel %vm1246, 1, 0
          %v1311 = vsel %vm1247, 1, 0
          %v1312 = vsel %vm1248, 1, 0
          %v1313 = vsel %vm1249, 1, 0
          %v1314 = vsel %vm1250, 1, 0
          %v1315 = vsel %vm1251, 1, 0
          %v1316 = vsel %vm1252, 1, 0
          %v1317 = vsel %vm1253, 1, 0
          %v1318 = vsel %vm1254, 1, 0
          %v1319 = vsel %vm1255, 1, 0
          %v1320 = vsel %vm1256, 1, 0
          %v1321 = vsel %vm1257, 1, 0
          %v1322 = vsel %vm1258, 1, 0
          %v1323 = vsel %vm1259, 1, 0
          %v1324 = vsel %vm1260, 1, 0
          %v1325 = vsel %vm1261, 1, 0
          %v1326 = vsel %vm1262, 1, 0
          %v1327 = vsel %vm1263, 1, 0
          %v1328 = vsel %vm1264, 1, 0
          %v1329 = vsel %vm1265, 1, 0
          %v1330 = vsel %vm1266, 1, 0
          %v1331 = vsel %vm1267, 1, 0
          %v1332 = vsel %vm1268, 1, 0
          %v1333 = vsel %vm1269, 1, 0
          %v1334 = vsel %vm1270, 1, 0
          %v1335 = vsel %vm1271, 1, 0
          %v1336 = vsel %vm1272, 1, 0
          %v1337 = vsel %vm1273, 1, 0
          %v1338 = vsel %vm1274, 1, 0
          %v1339 = vsel %vm1275, 1, 0
          %v1340 = vsel %vm1276, 1, 0
          %v1341 = vsel %vm1277, 1, 0
          %v1342 = vsel %vm1278, 1, 0
          %v1343 = vsel %vm1279, 1, 0
          %v1344 = vsel %vm1280, 1, 0
          %v1345 = vsel %vm1281, 1, 0
          %v1346 = vsel %vm1282, 1, 0
          %v1347 = vsel %vm1283, 1, 0
          %v1348 = vsel %vm1284, 1, 0
          %v1349 = vsel %vm1285, 1, 0
          %v1350 = vsel %vm1286, 1, 0
          %v1351 = vsel %vm1287, 1, 0
          %v1352 = vsel %vm1288, 1, 0
          %v1353 = vsel %vm1289, 1, 0
          %v1354 = vsel %vm1290, 1, 0
          %v1355 = vsel %vm1291, 1, 0
          %v1356 = vsel %vm1292, 1, 0
          %v1357 = vcvt.s32.f32 %v1293
          %v1358 = vcvt.s32.f32 %v1294
          %v1359 = vcvt.s32.f32 %v1295
          %v1360 = vcvt.s32.f32 %v1296
          %v1361 = vcvt.s32.f32 %v1297
          %v1362 = vcvt.s32.f32 %v1298
          %v1363 = vcvt.s32.f32 %v1299
          %v1364 = vcvt.s32.f32 %v1300
          %v1365 = vcvt.s32.f32 %v1301
          %v1366 = vcvt.s32.f32 %v1302
          %v1367 = vcvt.s32.f32 %v1303
          %v1368 = vcvt.s32.f32 %v1304
          %v1369 = vcvt.s32.f32 %v1305
          %v1370 = vcvt.s32.f32 %v1306
          %v1371 = vcvt.s32.f32 %v1307
          %v1372 = vcvt.s32.f32 %v1308
          %v1373 = vcvt.s32.f32 %v1309
          %v1374 = vcvt.s32.f32 %v1310
          %v1375 = vcvt.s32.f32 %v1311
          %v1376 = vcvt.s32.f32 %v1312
          %v1377 = vcvt.s32.f32 %v1313
          %v1378 = vcvt.s32.f32 %v1314
          %v1379 = vcvt.s32.f32 %v1315
          %v1380 = vcvt.s32.f32 %v1316
          %v1381 = vcvt.s32.f32 %v1317
          %v1382 = vcvt.s32.f32 %v1318
          %v1383 = vcvt.s32.f32 %v1319
          %v1384 = vcvt.s32.f32 %v1320
          %v1385 = vcvt.s32.f32 %v1321
          %v1386 = vcvt.s32.f32 %v1322
          %v1387 = vcvt.s32.f32 %v1323
          %v1388 = vcvt.s32.f32 %v1324
          %v1389 = vcvt.s32.f32 %v1325
          %v1390 = vcvt.s32.f32 %v1326
          %v1391 = vcvt.s32.f32 %v1327
          %v1392 = vcvt.s32.f32 %v1328
          %v1393 = vcvt.s32.f32 %v1329
          %v1394 = vcvt.s32.f32 %v1330
          %v1395 = vcvt.s32.f32 %v1331
          %v1396 = vcvt.s32.f32 %v1332
          %v1397 = vcvt.s32.f32 %v1333
          %v1398 = vcvt.s32.f32 %v1334
          %v1399 = vcvt.s32.f32 %v1335
          %v1400 = vcvt.s32.f32 %v1336
          %v1401 = vcvt.s32.f32 %v1337
          %v1402 = vcvt.s32.f32 %v1338
          %v1403 = vcvt.s32.f32 %v1339
          %v1404 = vcvt.s32.f32 %v1340
          %v1405 = vcvt.s32.f32 %v1341
          %v1406 = vcvt.s32.f32 %v1342
          %v1407 = vcvt.s32.f32 %v1343
          %v1408 = vcvt.s32.f32 %v1344
          %v1409 = vcvt.s32.f32 %v1345
          %v1410 = vcvt.s32.f32 %v1346
          %v1411 = vcvt.s32.f32 %v1347
          %v1412 = vcvt.s32.f32 %v1348
          %v1413 = vcvt.s32.f32 %v1349
          %v1414 = vcvt.s32.f32 %v1350
          %v1415 = vcvt.s32.f32 %v1351
          %v1416 = vcvt.s32.f32 %v1352
          %v1417 = vcvt.s32.f32 %v1353
          %v1418 = vcvt.s32.f32 %v1354
          %v1419 = vcvt.s32.f32 %v1355
          %v1420 = vcvt.s32.f32 %v1356
          %v1421 = vpack.c.bf16 %v1359, %v1357
          %v1422 = vpack.c.bf16 %v1360, %v1358
          %v1423 = vpack.c.bf16 %v1363, %v1361
          %v1424 = vpack.c.bf16 %v1364, %v1362
          %v1425 = vpack.c.bf16 %v1367, %v1365
          %v1426 = vpack.c.bf16 %v1368, %v1366
          %v1427 = vpack.c.bf16 %v1371, %v1369
          %v1428 = vpack.c.bf16 %v1372, %v1370
          %v1429 = vpack.c.bf16 %v1375, %v1373
          %v1430 = vpack.c.bf16 %v1376, %v1374
          %v1431 = vpack.c.bf16 %v1379, %v1377
          %v1432 = vpack.c.bf16 %v1380, %v1378
          %v1433 = vpack.c.bf16 %v1383, %v1381
          %v1434 = vpack.c.bf16 %v1384, %v1382
          %v1435 = vpack.c.bf16 %v1387, %v1385
          %v1436 = vpack.c.bf16 %v1388, %v1386
          %v1437 = vpack.c.bf16 %v1391, %v1389
          %v1438 = vpack.c.bf16 %v1392, %v1390
          %v1439 = vpack.c.bf16 %v1395, %v1393
          %v1440 = vpack.c.bf16 %v1396, %v1394
          %v1441 = vpack.c.bf16 %v1399, %v1397
          %v1442 = vpack.c.bf16 %v1400, %v1398
          %v1443 = vpack.c.bf16 %v1403, %v1401
          %v1444 = vpack.c.bf16 %v1404, %v1402
          %v1445 = vpack.c.bf16 %v1407, %v1405
          %v1446 = vpack.c.bf16 %v1408, %v1406
          %v1447 = vpack.c.bf16 %v1411, %v1409
          %v1448 = vpack.c.bf16 %v1412, %v1410
          %v1449 = vpack.c.bf16 %v1415, %v1413
          %v1450 = vpack.c.bf16 %v1416, %v1414
          %v1451 = vpack.c.bf16 %v1419, %v1417
          %v1452 = vpack.c.bf16 %v1420, %v1418
          %v1453 = vld [vmem:[#allocation2 + $0x30] sm:$0x3f]
          %v1454 = vld [vmem:[#allocation2 + $0x38] sm:$0x3f]
          %1455 = vmatprep.subr.bf16.mxu0 %v1422
          %1456 = vmatpush1.bf16.msra.mxu0 %v1421
          %1457 = vmatprep.subr.bf16.mxu0 %v1424
          %1458 = vmatpush1.bf16.msra.mxu0 %v1423
          %1459 = vmatprep.subr.bf16.mxu0 %v1426
          %1460 = vmatpush1.bf16.msra.mxu0 %v1425
          %1461 = vmatprep.subr.bf16.mxu0 %v1428
          %1462 = vmatpush1.bf16.msra.mxu0 %v1427
          %1463 = vmatprep.subr.bf16.mxu0 %v1430
          %1464 = vmatpush1.bf16.msra.mxu0 %v1429
          %1465 = vmatprep.subr.bf16.mxu0 %v1432
          %1466 = vmatpush1.bf16.msra.mxu0 %v1431
          %1467 = vmatprep.subr.bf16.mxu0 %v1434
          %1468 = vmatpush1.bf16.msra.mxu0 %v1433
          %1469 = vmatprep.subr.bf16.mxu0 %v1436
          %1470 = vmatpush1.bf16.msra.mxu0 %v1435
          %1471 = vmatprep.subr.bf16.mxu0 %v1438
          %1472 = vmatpush1.bf16.msra.mxu0 %v1437
          %1473 = vmatprep.subr.bf16.mxu0 %v1440
          %1474 = vmatpush1.bf16.msra.mxu0 %v1439
          %1475 = vmatprep.subr.bf16.mxu0 %v1442
          %1476 = vmatpush1.bf16.msra.mxu0 %v1441
          %1477 = vmatprep.subr.bf16.mxu0 %v1444
          %1478 = vmatpush1.bf16.msra.mxu0 %v1443
          %1479 = vmatprep.subr.bf16.mxu0 %v1446
          %1480 = vmatpush1.bf16.msra.mxu0 %v1445
          %1481 = vmatprep.subr.bf16.mxu0 %v1448
          %1482 = vmatpush1.bf16.msra.mxu0 %v1447
          %1483 = vmatprep.subr.bf16.mxu0 %v1450
          %1484 = vmatpush1.bf16.msra.mxu0 %v1449
          %1485 = vmatprep.subr.bf16.mxu0 %v1452
          %1486 = vmatpush1.bf16.msra.mxu0 %v1451
          %1487 = vmatprep.mubr.bf16.mxu0 %v612
          %1488 = vmatmul.mubr.bf16.gmra.mrb[0].mxu0 %v611
          %v1489 = vpop.f32.mrb[0].mxu0
          %v1490 = vadd.f32 0.0, %v1489
          %v1491 = vpop.f32.mrb[0].mxu0
          %v1492 = vadd.f32 0.0, %v1491
          %v1493 = vpop.f32.mrb[0].mxu0
          %v1494 = vpop.f32.mrb[0].mxu0
          %1495 = vdwg.mxu0
          %v1496 = vadd.f32 %v1453, %v1490
          %v1497 = vadd.f32 %v1454, %v1492
          %1498 = vst [vmem:[#allocation2 + $0x30] sm:$0x3f] %v1496
          %1499 = vst [vmem:[#allocation2 + $0x38] sm:$0x3f] %v1497
        $region48: #{tpu_custom_call.1} parent=31 // pred_fallthru
          _
        // Predicated region
        $region49: #{tpu_custom_call.1} parent=31 // pred_check
          %p1500 = pneg %p286
        $region50: #{tpu_custom_call.1} parent=31 // pred_check_branch
          %1502 = sbr.rel (%p1500) target = $region52
        $region51: #{tpu_custom_call.1} parent=31 // pred_region
          %v1503 = vld [vmem:[%s237] sm:$0xff]
          %vm1504 = vcmp.lt.s32.totalorder %v1503, 0
          %v1505 = vld [vmem:[%s3] sm:$0x3f]
          %v1506 = vld [vmem:[#allocation2] sm:$0x3f]
          %v1507 = vld [vmem:[#allocation2 + $0x8] sm:$0x3f]
          %v1508 = vld [vmem:[#allocation2 + $0x10] sm:$0x3f]
          %v1509 = vld [vmem:[#allocation2 + $0x18] sm:$0x3f]
          %v1510 = vld [vmem:[#allocation2 + $0x20] sm:$0x3f]
          %v1511 = vld [vmem:[#allocation2 + $0x28] sm:$0x3f]
          %v1512 = vld [vmem:[#allocation2 + $0x30] sm:$0x3f]
          %v1513 = vld [vmem:[#allocation2 + $0x38] sm:$0x3f]
          %v1514 = vsel %vm1504, 1, 0
          %v1515 = vlaneseq
          %v1516 = vshrl.u32 %v1515, 7
          %v1517 = vsub.s32 0, %v1516
          %v1518 = vrot.slane %v1514, %v1517
          %v1519 = vlaneseq
          %v1520 = vshrl.u32 %v1519, 7
          %v1521 = vsub.s32 1, %v1520
          %v1522 = vrot.slane %v1514, %v1521
          %v1523 = vlaneseq
          %v1524 = vshrl.u32 %v1523, 7
          %v1525 = vsub.s32 2, %v1524
          %v1526 = vrot.slane %v1514, %v1525
          %v1527 = vlaneseq
          %v1528 = vshrl.u32 %v1527, 7
          %v1529 = vsub.s32 3, %v1528
          %v1530 = vrot.slane %v1514, %v1529
          %v1531 = vlaneseq
          %v1532 = vshrl.u32 %v1531, 7
          %v1533 = vsub.s32 4, %v1532
          %v1534 = vrot.slane %v1514, %v1533
          %v1535 = vlaneseq
          %v1536 = vshrl.u32 %v1535, 7
          %v1537 = vsub.s32 5, %v1536
          %v1538 = vrot.slane %v1514, %v1537
          %v1539 = vlaneseq
          %v1540 = vshrl.u32 %v1539, 7
          %v1541 = vsub.s32 6, %v1540
          %v1542 = vrot.slane %v1514, %v1541
          %v1543 = vlaneseq
          %v1544 = vshrl.u32 %v1543, 7
          %v1545 = vsub.s32 7, %v1544
          %v1546 = vrot.slane %v1514, %v1545
          %vm1547 = vcmp.eq.s32.totalorder %v1518, 1
          %vm1548 = vcmp.eq.s32.totalorder %v1522, 1
          %vm1549 = vcmp.eq.s32.totalorder %v1526, 1
          %vm1550 = vcmp.eq.s32.totalorder %v1530, 1
          %vm1551 = vcmp.eq.s32.totalorder %v1534, 1
          %vm1552 = vcmp.eq.s32.totalorder %v1538, 1
          %vm1553 = vcmp.eq.s32.totalorder %v1542, 1
          %vm1554 = vcmp.eq.s32.totalorder %v1546, 1
          %1556 = vset.pattern.permute.xlu0 0
          %1557 = vperm.xlu0 %1556, %v1505
          %v1558 = vpop.permute.xlu0 %1557
          %v1560 = vsel %vm1547, %v1558, %v1506
          %v1561 = vsel %vm1548, %v1558, %v1507
          %v1562 = vsel %vm1549, %v1558, %v1508
          %v1563 = vsel %vm1550, %v1558, %v1509
          %v1564 = vsel %vm1551, %v1558, %v1510
          %v1565 = vsel %vm1552, %v1558, %v1511
          %v1566 = vsel %vm1553, %v1558, %v1512
          %v1567 = vsel %vm1554, %v1558, %v1513
          %1568 = vst [vmem:[%s273] sm:$0x3f] %v1560
          %1569 = vst [vmem:[%s273 + $0x8] sm:$0x3f] %v1561
          %1570 = vst [vmem:[%s273 + $0x10] sm:$0x3f] %v1562
          %1571 = vst [vmem:[%s273 + $0x18] sm:$0x3f] %v1563
          %1572 = vst [vmem:[%s273 + $0x20] sm:$0x3f] %v1564
          %1573 = vst [vmem:[%s273 + $0x28] sm:$0x3f] %v1565
          %1574 = vst [vmem:[%s273 + $0x30] sm:$0x3f] %v1566
          %1575 = vst [vmem:[%s273 + $0x38] sm:$0x3f] %v1567
        $region52: #{tpu_custom_call.1} parent=31 // pred_fallthru
          _
        %s1576 = sand.u32 %s144, 1
        %s1577 = scalar_lea.sflag [#allocation8], %s1576
        %s1578 = sand.u32 %s144, 1
        %s1579 = smul.addr %s1578, 64
        %s1580 = scalar_lea.vmem [#allocation11], %s1579
        // Predicated region
        $region53: #{tpu_custom_call.1} parent=31 // pred_check
          %p1581 = pneg %p154
        $region54: #{tpu_custom_call.1} parent=31 // pred_check_branch
          %1583 = sbr.rel (%p1581) target = $region56
        $region55: #{tpu_custom_call.1} parent=31 // pred_region
          %s1584 = smul.u32 8, %s37
          %s1586 = ssub.s32 1024, 1024
          %1587 = vsyncadd %s1577, %s1586
          %s1588 = smul.addr %s1584, 128
          %s1589 = scalar_lea.hbm %s5, %s1588
          %s1591 = sshll.u32 %s1580, 4
          %s1592 = int_to_ptr.vmem [resolvable:$true] %s1591
          %1594 = dma.vmem_to_hbm [thread:$0]  %s1592, 1024, %s1589, %s1577
        $region56: #{tpu_custom_call.1} parent=31 // pred_fallthru
          _
      $region32: #{tpu_custom_call.1} parent=5 // pred_fallthru
        _
      %p1595 = scmp.le.s32.totalorder 2, %s28
      // Predicated region
      $region57: #{tpu_custom_call.1} parent=5 // pred_check
        %p1596 = pneg %p1595
      $region58: #{tpu_custom_call.1} parent=5 // pred_check_branch
        %1598 = sbr.rel (%p1596) target = $region60
      $region59: #{tpu_custom_call.1} parent=5 // pred_region
        %s1599 = ssub.s32 %s28, 2
        // Predicated region
        $region61: #{tpu_custom_call.1} parent=59 // pred_check
          %p1600 = pneg %p160
        $region62: #{tpu_custom_call.1} parent=59 // pred_check_branch
          %1602 = sbr.rel (%p1600) target = $region64
        $region63: #{tpu_custom_call.1} parent=59 // pred_region
          %s1603 = sand.u32 %s145, 1
          %s1604 = scalar_lea.sflag [#allocation8], %s1603
          %s1605 = sand.u32 %s145, 1
          %s1606 = smul.addr %s1605, 64
          %s1607 = scalar_lea.vmem [#allocation11], %s1606
          %1608 = dma.done %s1604, 1024
        $region64: #{tpu_custom_call.1} parent=59 // pred_fallthru
          _
      $region60: #{tpu_custom_call.1} parent=5 // pred_fallthru
        _
    $region6: #{tpu_custom_call.1} parent=1 // loop_footer
      %s32 = sadd.s32 1, %s28
    $region7: #{tpu_custom_call.1} parent=1 // loop_footer_branch
      %27 = sbr.rel target = $region3
    $region8: #{tpu_custom_call.1} parent=1 // loop_exit
      _
    %1609 = vsyncpa [#allocation7], 1
    %s1610 = scalar_lea.sflag [#allocation7], 1
    %1611 = vsyncpa %s1610, 1
    %1612 = vsyncpa [#allocation10], 1
    %s1613 = scalar_lea.sflag [#allocation10], 1
    %1614 = vsyncpa %s1613, 1
    %1615 = vsyncpa [#allocation8], 1
    %s1616 = scalar_lea.sflag [#allocation8], 1
    %1617 = vsyncpa %s1616, 1

</llo_original>
